<compile_context>
chip_gen: v5e
topology: v5e:2x2
jax: 0.10.0
libtpu: 0.0.40
codegen_flags: <defaults>
</compile_context>

<pallas_src>
import jax
import jax.numpy as jnp
from jax.experimental import pallas as pl
from jax.experimental.pallas import tpu as pltpu

BN_EPS = 1e-5


# --------------------------------------------------------------------------
# Fused Pallas kernel
# --------------------------------------------------------------------------
def _fused_unet_attn_kernel(u_ref, s_ref, w4_ref, b4_ref, em_ref, om_ref,
                            wg_ref, wx_ref, cgx_ref, wp_ref, cp_ref, out_ref):
    """One grid step = one batch element x one block of `hb` pre-upsample rows.

    Layout: channels on sublanes, flattened spatial on lanes (2-D slabs).
      u_ref   (up_in_c, hb*W) f32   pre-upsample rows (lane = r*W + j)
      s_ref   (C, hb*4W)      f32   skip feature, image order
                                    (lane = r*4W + r1*2W + col)
      w4_ref  (4C, up_in_c)   bf16  merged shuf conv W, rows = (2*r1+r2)*C + c
      b4_ref  (4C, 1)         f32   merged shuf conv bias
      em/om   (W, 2W)         bf16  0/1 even / odd lane-placement matrices
      wg/wx   (C, C)          bf16  BN-folded g1 / x1 1x1 convs
      cgx_ref (C, 1)          f32   folded g1+x1 shift
      wp_ref  (1, C)          bf16  BN-folded psi conv
      cp_ref  (1,)            f32   psi shift (SMEM scalar)
      out_ref (C, hb*4W)      f32   output block (also stages up_out)
    """
    C = out_ref.shape[0]
    W = em_ref.shape[0]
    hb = u_ref.shape[1] // W
    bf16 = jnp.bfloat16

    # ---- PixelShuffle_ICNR conv: one merged matmul (4C, up_in_c)@(up_in_c, hb*W)
    y4 = jnp.dot(w4_ref[...], u_ref[...].astype(bf16),
                 preferred_element_type=jnp.float32)
    y4 = jnp.maximum(y4 + b4_ref[...], 0.0)                  # (4C, hb*W) f32

    # ---- pixel shuffle: even/odd lane interleave per (input row, row parity),
    #      stored as contiguous 2W-lane chunks into the output block (which is
    #      reused as the up_out staging buffer).
    em = em_ref[...]
    om = om_ref[...]
    for r in range(hb):                       # static unroll over the row block
        cols = slice(r * W, (r + 1) * W)
        for r1 in range(2):
            ye = y4[(2 * r1) * C:(2 * r1 + 1) * C, cols].astype(bf16)     # r2=0
            yo = y4[(2 * r1 + 1) * C:(2 * r1 + 2) * C, cols].astype(bf16)  # r2=1
            chunk = (jnp.dot(ye, em, preferred_element_type=jnp.float32) +
                     jnp.dot(yo, om, preferred_element_type=jnp.float32))
            dst = (r * 4 + r1 * 2) * W
            out_ref[:, dst:dst + 2 * W] = chunk               # (C, 2W) chunk

    # ---- AttentionBlock, batched over the whole row block (hb*4W lanes) ----
    up4 = out_ref[...]                                        # (C, hb*4W) f32
    a = jnp.dot(wg_ref[...], s_ref[...].astype(bf16),
                preferred_element_type=jnp.float32)
    a = a + jnp.dot(wx_ref[...], up4.astype(bf16),
                    preferred_element_type=jnp.float32)
    p = jnp.maximum(a + cgx_ref[...], 0.0)                    # (C, hb*4W)
    psi = jax.nn.sigmoid(
        jnp.dot(wp_ref[...], p.astype(bf16),
                preferred_element_type=jnp.float32) + cp_ref[0])   # (1, hb*4W)
    out_ref[...] = up4 * psi


# --------------------------------------------------------------------------
# Wrapper helpers
# --------------------------------------------------------------------------
def _fold_bn(conv_bias, gamma, beta, mean, var, eps=BN_EPS):
    scale = gamma / jnp.sqrt(var + eps)
    shift = (conv_bias - mean) * scale + beta
    return scale, shift


def _vmem_limit_bytes():
    # 128 MiB physical VMEM on v5e/v6e, 64 MiB on v7x: take ~3/4 of whatever
    # chip we run on (capped), falling back to a conservative 48 MiB.
    try:
        cap = pltpu.get_tpu_info().vmem_capacity_bytes
    except Exception:
        cap = 64 * 1024 * 1024
    return int(min(100 * 1024 * 1024, (cap * 3) // 4))


def _pick_row_block(N, H, W, C, up_in_c, budget_bytes):
    """Largest hb (<=32) dividing H whose blocks keep the lane dim 128-aligned
    (or full-extent) and whose double-buffered f32 activation blocks fit."""
    L = 4 * W
    cand = [d for d in range(min(H, 32), 0, -1)
            if H % d == 0 and (d == H or (d * W) % 128 == 0)]
    if not cand:
        cand = [H]                       # full-extent block is always legal
    fits = [d for d in cand
            if 2 * 4 * d * (up_in_c * W + 2 * C * L) <= budget_bytes]
    hb = fits[0] if fits else cand[-1]
    # dual-TensorCore chips (v7x): keep at least 2 parallel grid steps.
    if N * (H // hb) < 2:
        smaller = [d for d in cand if H // d >= 2]
        if smaller:
            hb = smaller[0]
    return hb


# --------------------------------------------------------------------------
# Wrapper
# --------------------------------------------------------------------------
def unet_block_attention_pallas(up_in, s, params, *, row_block=None):
    """Full UnetBlockAttention forward (fused Pallas hot path)."""
    N, up_in_c, H, W = up_in.shape
    C = up_in_c // 2
    n_s, c_s, h_s, w_s = s.shape
    assert n_s == N and h_s == 2 * H and w_s == 2 * W, \
        "F.interpolate branch not implemented (spatial sizes must match)"
    assert c_s == C, "attention add requires x_in_c == up_in_c // 2"
    L = 4 * W

    vmem_limit = _vmem_limit_bytes()
    hb = (row_block if row_block is not None
          else _pick_row_block(N, H, W, C, up_in_c, (vmem_limit * 4) // 5))
    assert H % hb == 0

    bf16 = jnp.bfloat16

    # ---- fold / reshape parameters (tiny tensors, trace-time only) ----
    # PixelShuffle conv-output-channel order is o = 4*c + 2*r1 + r2; regroup
    # rows as (2*r1 + r2)*C + c so each sub-pixel is a contiguous C-row slab.
    w4 = (params["shuf_w"].T.reshape(C, 4, up_in_c)
          .transpose(1, 0, 2).reshape(4 * C, up_in_c)).astype(bf16)
    b4 = params["shuf_b"].reshape(C, 4).T.reshape(4 * C, 1)
    ag, cg = _fold_bn(params["g1_b"], params["g1_gamma"], params["g1_beta"],
                      params["g1_mean"], params["g1_var"])
    ax, cx = _fold_bn(params["x1_b"], params["x1_gamma"], params["x1_beta"],
                      params["x1_mean"], params["x1_var"])
    ap, cp = _fold_bn(params["psi_b"], params["psi_gamma"], params["psi_beta"],
                      params["psi_mean"], params["psi_var"])
    wg = (params["g1_w"] * ag[None, :]).T.astype(bf16)          # (C, C)
    wx = (params["x1_w"] * ax[None, :]).T.astype(bf16)          # (C, C)
    wp = ((params["psi_w"][:, 0] * ap[0])[None, :]).astype(bf16)  # (1, C)
    cgx = (cg + cx)[:, None].astype(jnp.float32)                # (C, 1)
    cps = cp.reshape(1).astype(jnp.float32)                     # (1,) SMEM

    # 0/1 even / odd lane-placement matrices: chunk[:, 2j + r2] = y_{r2}[:, j].
    j = jnp.arange(W)[:, None]
    m = jnp.arange(2 * W)[None, :]
    em = (m == 2 * j).astype(bf16)            # (W, 2W)
    om = (m == 2 * j + 1).astype(bf16)        # (W, 2W)

    # Free reshapes to 2-D (channel, spatial) slabs.
    u2 = up_in.reshape(N, up_in_c, H * W)
    s2 = s.reshape(N, C, H * L)

    grid = (N, H // hb)
    row_map = lambda n, h: (n, 0, h)
    const_map = lambda n, h: (0, 0)

    out2 = pl.pallas_call(
        _fused_unet_attn_kernel,
        out_shape=jax.ShapeDtypeStruct((N, C, H * L), jnp.float32),
        grid=grid,
        in_specs=[
            pl.BlockSpec((None, up_in_c, hb * W), row_map),      # up_in rows
            pl.BlockSpec((None, C, hb * L), row_map),            # skip rows
            pl.BlockSpec((4 * C, up_in_c), const_map),           # merged shuf W
            pl.BlockSpec((4 * C, 1), const_map),                 # merged shuf b
            pl.BlockSpec((W, 2 * W), const_map),                 # even placement
            pl.BlockSpec((W, 2 * W), const_map),                 # odd placement
            pl.BlockSpec((C, C), const_map),                     # g1 W (BN folded)
            pl.BlockSpec((C, C), const_map),                     # x1 W (BN folded)
            pl.BlockSpec((C, 1), const_map),                     # g1+x1 shift
            pl.BlockSpec((1, C), const_map),                     # psi W (BN folded)
            pl.BlockSpec(memory_space=pltpu.MemorySpace.SMEM),   # psi shift scalar
        ],
        out_specs=pl.BlockSpec((None, C, hb * L), row_map),
        compiler_params=pltpu.CompilerParams(
            dimension_semantics=("parallel", "parallel"),
            vmem_limit_bytes=vmem_limit),
    )(u2, s2, w4, b4, em, om, wg, wx, cgx, wp, cps)

    return out2.reshape(N, C, 2 * H, 2 * W)


# --------------------------------------------------------------------------
# Pure-JAX reference (mimics the PyTorch NCHW forward, eval-mode BN)
# --------------------------------------------------------------------------
def pixel_shuffle_nchw(x, r):
    n, cc, h, w = x.shape
    x = x.reshape(n, cc // (r * r), r, r, h, w)
    x = x.transpose(0, 1, 4, 2, 5, 3)
    return x.reshape(n, cc // (r * r), h * r, w * r)


def _conv1x1_nchw(x, w, b):
    return jnp.einsum("nchw,cd->ndhw", x, w) + b.reshape(1, -1, 1, 1)


def _bn_eval_nchw(x, gamma, beta, mean, var, eps=BN_EPS):
    scale = (gamma / jnp.sqrt(var + eps)).reshape(1, -1, 1, 1)
    return (x - mean.reshape(1, -1, 1, 1)) * scale + beta.reshape(1, -1, 1, 1)


def unet_block_attention_ref(up_in, s, p):
    y = jnp.maximum(_conv1x1_nchw(up_in, p["shuf_w"], p["shuf_b"]), 0.0)
    up_out = pixel_shuffle_nchw(y, 2)
    g1 = _bn_eval_nchw(_conv1x1_nchw(s, p["g1_w"], p["g1_b"]),
                       p["g1_gamma"], p["g1_beta"], p["g1_mean"], p["g1_var"])
    x1 = _bn_eval_nchw(_conv1x1_nchw(up_out, p["x1_w"], p["x1_b"]),
                       p["x1_gamma"], p["x1_beta"], p["x1_mean"], p["x1_var"])
    psi = jnp.maximum(g1 + x1, 0.0)
    psi = _bn_eval_nchw(_conv1x1_nchw(psi, p["psi_w"], p["psi_b"]),
                        p["psi_gamma"], p["psi_beta"], p["psi_mean"], p["psi_var"])
    psi = jax.nn.sigmoid(psi)
    return up_out * psi


# --------------------------------------------------------------------------
# Deterministic parameter init (shapes implied by the module __init__)
# --------------------------------------------------------------------------
def init_params(key, up_in_c, x_in_c):
    keys = jax.random.split(key, 12)
    c_shuf_out = (up_in_c // 2) * 4          # conv inside PixelShuffle_ICNR (scale=2)
    c = x_in_c                               # final_div=True => g_out_c = x_c = x_in_c
    p = {
        # PixelShuffle_ICNR 1x1 conv (weights stored (Cin, Cout))
        "shuf_w": 0.2 * jax.random.normal(keys[0], (up_in_c, c_shuf_out), jnp.float32),
        "shuf_b": 0.1 * jax.random.normal(keys[1], (c_shuf_out,), jnp.float32),
        # g1: Conv2d(x_in_c, x_in_c, 1) + BatchNorm2d(x_in_c)
        "g1_w": 0.3 * jax.random.normal(keys[2], (c, c), jnp.float32),
        "g1_b": 0.1 * jax.random.normal(keys[3], (c,), jnp.float32),
        "g1_gamma": 1.0 + 0.1 * jax.random.normal(keys[4], (c,), jnp.float32),
        "g1_beta": 0.05 * jax.random.normal(keys[5], (c,), jnp.float32),
        "g1_mean": 0.1 * jax.random.normal(keys[6], (c,), jnp.float32),
        "g1_var": 1.0 + 0.4 * jax.random.uniform(keys[7], (c,), jnp.float32),
        # x1: Conv2d(x_c, x_c, 1) + BatchNorm2d(x_c)
        "x1_w": 0.3 * jax.random.normal(keys[8], (c, c), jnp.float32),
        "x1_b": 0.1 * jax.random.normal(keys[9], (c,), jnp.float32),
        "x1_gamma": jnp.linspace(0.9, 1.1, c, dtype=jnp.float32),
        "x1_beta": jnp.linspace(-0.05, 0.05, c, dtype=jnp.float32),
        "x1_mean": jnp.linspace(-0.1, 0.1, c, dtype=jnp.float32),
        "x1_var": jnp.linspace(0.8, 1.2, c, dtype=jnp.float32),
        # psi: Conv2d(x_c, 1, 1) + BatchNorm2d(1)
        "psi_w": 0.3 * jax.random.normal(keys[10], (c, 1), jnp.float32),
        "psi_b": 0.1 * jax.random.normal(keys[11], (1,), jnp.float32),
        "psi_gamma": jnp.array([1.05], jnp.float32),
        "psi_beta": jnp.array([0.02], jnp.float32),
        "psi_mean": jnp.array([0.03], jnp.float32),
        "psi_var": jnp.array([1.1], jnp.float32),
    }
    return p


if __name__ == "__main__":
    # Small shapes consistent with the module:
    #   up_in_c = 8, x_in_c = up_in_c // 2 = 4  (so AttentionBlock channels line up)
    #   up_in spatial 8x8 -> up_out spatial 16x16 == hook.stored spatial (no interpolate)
    N, UP_IN_C, X_IN_C = 2, 8, 4
    H, W = 8, 8

    key = jax.random.PRNGKey(0)
    k_up, k_s, k_p = jax.random.split(key, 3)
    up_in = jax.random.normal(k_up, (N, UP_IN_C, H, W), jnp.float32)
    s_hook = jax.random.normal(k_s, (N, X_IN_C, 2 * H, 2 * W), jnp.float32)  # hook.stored
    params = init_params(k_p, UP_IN_C, X_IN_C)

    out = jax.jit(unet_block_attention_pallas)(up_in, s_hook, params)
    out = jax.block_until_ready(out)

    ref = jax.block_until_ready(unet_block_attention_ref(up_in, s_hook, params))
    assert out.shape == (N, X_IN_C, 2 * H, 2 * W), out.shape
    # bf16 MXU operands (f32 accumulate) => slightly looser tolerance than pure f32.
    assert jnp.allclose(out, ref, rtol=1e-2, atol=1e-2), \
        float(jnp.max(jnp.abs(out - ref)))

    print("KERNEL_OK")
</pallas_src>

<mosaic_0001>
module attributes {stable_mosaic.version = 11 : i64} {
  func.func @_fused_unet_attn_kernel(%arg0: i32, %arg1: i32, %arg2: memref<1x8x64xf32, #tpu.memory_space<vmem>>, %arg3: memref<1x4x256xf32, #tpu.memory_space<vmem>>, %arg4: memref<16x8xbf16, #tpu.memory_space<vmem>>, %arg5: memref<16x1xf32, #tpu.memory_space<vmem>>, %arg6: memref<8x16xbf16, #tpu.memory_space<vmem>>, %arg7: memref<8x16xbf16, #tpu.memory_space<vmem>>, %arg8: memref<4x4xbf16, #tpu.memory_space<vmem>>, %arg9: memref<4x4xbf16, #tpu.memory_space<vmem>>, %arg10: memref<4x1xf32, #tpu.memory_space<vmem>>, %arg11: memref<1x4xbf16, #tpu.memory_space<vmem>>, %arg12: memref<1xf32, #tpu.memory_space<smem>>, %arg13: memref<1x4x256xf32, #tpu.memory_space<vmem>>) attributes {dimension_semantics = [#tpu.dimension_semantics<parallel>, #tpu.dimension_semantics<parallel>], iteration_bounds = array<i64: 2, 1>, scalar_prefetch = 0 : i64, scratch_operands = 0 : i64, tpu.core_type = #tpu.core_type<tc>, window_params = [{transform_indices = @transform_0, window_bounds = array<i64: 1, 8, 64>}, {transform_indices = @transform_1, window_bounds = array<i64: 1, 4, 256>}, {pipeline_mode = #tpu.pipeline_mode<synchronous>, transform_indices = @transform_2, window_bounds = array<i64: 16, 8>}, {pipeline_mode = #tpu.pipeline_mode<synchronous>, transform_indices = @transform_3, window_bounds = array<i64: 16, 1>}, {pipeline_mode = #tpu.pipeline_mode<synchronous>, transform_indices = @transform_4, window_bounds = array<i64: 8, 16>}, {pipeline_mode = #tpu.pipeline_mode<synchronous>, transform_indices = @transform_5, window_bounds = array<i64: 8, 16>}, {pipeline_mode = #tpu.pipeline_mode<synchronous>, transform_indices = @transform_6, window_bounds = array<i64: 4, 4>}, {pipeline_mode = #tpu.pipeline_mode<synchronous>, transform_indices = @transform_7, window_bounds = array<i64: 4, 4>}, {pipeline_mode = #tpu.pipeline_mode<synchronous>, transform_indices = @transform_8, window_bounds = array<i64: 4, 1>}, {pipeline_mode = #tpu.pipeline_mode<synchronous>, transform_indices = @transform_9, window_bounds = array<i64: 1, 4>}, {transform_indices = @transform_10, window_bounds = array<i64: 1>}, {transform_indices = @transform_11, window_bounds = array<i64: 1, 4, 256>}]} {
    %c0 = arith.constant 0 : index
    %c0_0 = arith.constant 0 : index
    %0 = vector.load %arg4[%c0, %c0_0] : memref<16x8xbf16, #tpu.memory_space<vmem>>, vector<16x8xbf16>
    %c0_1 = arith.constant 0 : index
    %c0_2 = arith.constant 0 : index
    %c0_3 = arith.constant 0 : index
    %1 = vector.load %arg2[%c0_1, %c0_2, %c0_3] : memref<1x8x64xf32, #tpu.memory_space<vmem>>, vector<1x8x64xf32>
    %2 = vector.shape_cast %1 : vector<1x8x64xf32> to vector<8x64xf32>
    %3 = arith.truncf %2 : vector<8x64xf32> to vector<8x64xbf16>
    %cst = arith.constant dense<0.000000e+00> : vector<16x64xf32>
    %4 = tpu.matmul %0, %3, %cst {dimension_numbers = #tpu.dot_dimension_numbers<[1], [0], [0], [1], [0, 0, 1, 1], [], []>} : vector<16x8xbf16>, vector<8x64xbf16>, vector<16x64xf32> -> vector<16x64xf32>
    %c0_4 = arith.constant 0 : index
    %c0_5 = arith.constant 0 : index
    %5 = vector.load %arg5[%c0_4, %c0_5] : memref<16x1xf32, #tpu.memory_space<vmem>>, vector<16x1xf32>
    %6 = vector.broadcast %5 : vector<16x1xf32> to vector<16x64xf32>
    %7 = arith.addf %4, %6 : vector<16x64xf32>
    %cst_6 = arith.constant 0.000000e+00 : f32
    %8 = vector.broadcast %cst_6 : f32 to vector<16x64xf32>
    %9 = arith.maximumf %7, %8 : vector<16x64xf32>
    %c0_7 = arith.constant 0 : index
    %c0_8 = arith.constant 0 : index
    %10 = vector.load %arg6[%c0_7, %c0_8] : memref<8x16xbf16, #tpu.memory_space<vmem>>, vector<8x16xbf16>
    %c0_9 = arith.constant 0 : index
    %c0_10 = arith.constant 0 : index
    %11 = vector.load %arg7[%c0_9, %c0_10] : memref<8x16xbf16, #tpu.memory_space<vmem>>, vector<8x16xbf16>
    %12 = vector.extract_strided_slice %9 {offsets = [0, 0], sizes = [4, 8], strides = [1, 1]} : vector<16x64xf32> to vector<4x8xf32>
    %13 = arith.truncf %12 : vector<4x8xf32> to vector<4x8xbf16>
    %14 = vector.extract_strided_slice %9 {offsets = [4, 0], sizes = [4, 8], strides = [1, 1]} : vector<16x64xf32> to vector<4x8xf32>
    %15 = arith.truncf %14 : vector<4x8xf32> to vector<4x8xbf16>
    %cst_11 = arith.constant dense<0.000000e+00> : vector<4x16xf32>
    %16 = tpu.matmul %13, %10, %cst_11 {dimension_numbers = #tpu.dot_dimension_numbers<[1], [0], [0], [1], [0, 0, 1, 1], [], []>} : vector<4x8xbf16>, vector<8x16xbf16>, vector<4x16xf32> -> vector<4x16xf32>
    %cst_12 = arith.constant dense<0.000000e+00> : vector<4x16xf32>
    %17 = tpu.matmul %15, %11, %cst_12 {dimension_numbers = #tpu.dot_dimension_numbers<[1], [0], [0], [1], [0, 0, 1, 1], [], []>} : vector<4x8xbf16>, vector<8x16xbf16>, vector<4x16xf32> -> vector<4x16xf32>
    %18 = arith.addf %16, %17 : vector<4x16xf32>
    %c0_13 = arith.constant 0 : index
    %c0_14 = arith.constant 0 : index
    %c0_15 = arith.constant 0 : index
    %19 = vector.load %arg13[%c0_13, %c0_14, %c0_15] : memref<1x4x256xf32, #tpu.memory_space<vmem>>, vector<1x4x16xf32>
    %20 = vector.shape_cast %19 : vector<1x4x16xf32> to vector<4x16xf32>
    %21 = vector.shape_cast %18 : vector<4x16xf32> to vector<1x4x16xf32>
    tpu.vector_store %arg13[%c0_13, %c0_14, %c0_15], %21 {strides = array<i32>} : memref<1x4x256xf32, #tpu.memory_space<vmem>>, vector<1x4x16xf32>,
    %22 = vector.extract_strided_slice %9 {offsets = [8, 0], sizes = [4, 8], strides = [1, 1]} : vector<16x64xf32> to vector<4x8xf32>
    %23 = arith.truncf %22 : vector<4x8xf32> to vector<4x8xbf16>
    %24 = vector.extract_strided_slice %9 {offsets = [12, 0], sizes = [4, 8], strides = [1, 1]} : vector<16x64xf32> to vector<4x8xf32>
    %25 = arith.truncf %24 : vector<4x8xf32> to vector<4x8xbf16>
    %cst_16 = arith.constant dense<0.000000e+00> : vector<4x16xf32>
    %26 = tpu.matmul %23, %10, %cst_16 {dimension_numbers = #tpu.dot_dimension_numbers<[1], [0], [0], [1], [0, 0, 1, 1], [], []>} : vector<4x8xbf16>, vector<8x16xbf16>, vector<4x16xf32> -> vector<4x16xf32>
    %cst_17 = arith.constant dense<0.000000e+00> : vector<4x16xf32>
    %27 = tpu.matmul %25, %11, %cst_17 {dimension_numbers = #tpu.dot_dimension_numbers<[1], [0], [0], [1], [0, 0, 1, 1], [], []>} : vector<4x8xbf16>, vector<8x16xbf16>, vector<4x16xf32> -> vector<4x16xf32>
    %28 = arith.addf %26, %27 : vector<4x16xf32>
    %c0_18 = arith.constant 0 : index
    %c0_19 = arith.constant 0 : index
    %c16 = arith.constant 16 : index
    %29 = vector.load %arg13[%c0_18, %c0_19, %c16] : memref<1x4x256xf32, #tpu.memory_space<vmem>>, vector<1x4x16xf32>
    %30 = vector.shape_cast %29 : vector<1x4x16xf32> to vector<4x16xf32>
    %31 = vector.shape_cast %28 : vector<4x16xf32> to vector<1x4x16xf32>
    tpu.vector_store %arg13[%c0_18, %c0_19, %c16], %31 {strides = array<i32>} : memref<1x4x256xf32, #tpu.memory_space<vmem>>, vector<1x4x16xf32>,
    %32 = vector.extract_strided_slice %9 {offsets = [0, 8], sizes = [4, 8], strides = [1, 1]} : vector<16x64xf32> to vector<4x8xf32>
    %33 = arith.truncf %32 : vector<4x8xf32> to vector<4x8xbf16>
    %34 = vector.extract_strided_slice %9 {offsets = [4, 8], sizes = [4, 8], strides = [1, 1]} : vector<16x64xf32> to vector<4x8xf32>
    %35 = arith.truncf %34 : vector<4x8xf32> to vector<4x8xbf16>
    %cst_20 = arith.constant dense<0.000000e+00> : vector<4x16xf32>
    %36 = tpu.matmul %33, %10, %cst_20 {dimension_numbers = #tpu.dot_dimension_numbers<[1], [0], [0], [1], [0, 0, 1, 1], [], []>} : vector<4x8xbf16>, vector<8x16xbf16>, vector<4x16xf32> -> vector<4x16xf32>
    %cst_21 = arith.constant dense<0.000000e+00> : vector<4x16xf32>
    %37 = tpu.matmul %35, %11, %cst_21 {dimension_numbers = #tpu.dot_dimension_numbers<[1], [0], [0], [1], [0, 0, 1, 1], [], []>} : vector<4x8xbf16>, vector<8x16xbf16>, vector<4x16xf32> -> vector<4x16xf32>
    %38 = arith.addf %36, %37 : vector<4x16xf32>
    %c0_22 = arith.constant 0 : index
    %c0_23 = arith.constant 0 : index
    %c32 = arith.constant 32 : index
    %39 = vector.load %arg13[%c0_22, %c0_23, %c32] : memref<1x4x256xf32, #tpu.memory_space<vmem>>, vector<1x4x16xf32>
    %40 = vector.shape_cast %39 : vector<1x4x16xf32> to vector<4x16xf32>
    %41 = vector.shape_cast %38 : vector<4x16xf32> to vector<1x4x16xf32>
    tpu.vector_store %arg13[%c0_22, %c0_23, %c32], %41 {strides = array<i32>} : memref<1x4x256xf32, #tpu.memory_space<vmem>>, vector<1x4x16xf32>,
    %42 = vector.extract_strided_slice %9 {offsets = [8, 8], sizes = [4, 8], strides = [1, 1]} : vector<16x64xf32> to vector<4x8xf32>
    %43 = arith.truncf %42 : vector<4x8xf32> to vector<4x8xbf16>
    %44 = vector.extract_strided_slice %9 {offsets = [12, 8], sizes = [4, 8], strides = [1, 1]} : vector<16x64xf32> to vector<4x8xf32>
    %45 = arith.truncf %44 : vector<4x8xf32> to vector<4x8xbf16>
    %cst_24 = arith.constant dense<0.000000e+00> : vector<4x16xf32>
    %46 = tpu.matmul %43, %10, %cst_24 {dimension_numbers = #tpu.dot_dimension_numbers<[1], [0], [0], [1], [0, 0, 1, 1], [], []>} : vector<4x8xbf16>, vector<8x16xbf16>, vector<4x16xf32> -> vector<4x16xf32>
    %cst_25 = arith.constant dense<0.000000e+00> : vector<4x16xf32>
    %47 = tpu.matmul %45, %11, %cst_25 {dimension_numbers = #tpu.dot_dimension_numbers<[1], [0], [0], [1], [0, 0, 1, 1], [], []>} : vector<4x8xbf16>, vector<8x16xbf16>, vector<4x16xf32> -> vector<4x16xf32>
    %48 = arith.addf %46, %47 : vector<4x16xf32>
    %c0_26 = arith.constant 0 : index
    %c0_27 = arith.constant 0 : index
    %c48 = arith.constant 48 : index
    %49 = vector.load %arg13[%c0_26, %c0_27, %c48] : memref<1x4x256xf32, #tpu.memory_space<vmem>>, vector<1x4x16xf32>
    %50 = vector.shape_cast %49 : vector<1x4x16xf32> to vector<4x16xf32>
    %51 = vector.shape_cast %48 : vector<4x16xf32> to vector<1x4x16xf32>
    tpu.vector_store %arg13[%c0_26, %c0_27, %c48], %51 {strides = array<i32>} : memref<1x4x256xf32, #tpu.memory_space<vmem>>, vector<1x4x16xf32>,
    %52 = vector.extract_strided_slice %9 {offsets = [0, 16], sizes = [4, 8], strides = [1, 1]} : vector<16x64xf32> to vector<4x8xf32>
    %53 = arith.truncf %52 : vector<4x8xf32> to vector<4x8xbf16>
    %54 = vector.extract_strided_slice %9 {offsets = [4, 16], sizes = [4, 8], strides = [1, 1]} : vector<16x64xf32> to vector<4x8xf32>
    %55 = arith.truncf %54 : vector<4x8xf32> to vector<4x8xbf16>
    %cst_28 = arith.constant dense<0.000000e+00> : vector<4x16xf32>
    %56 = tpu.matmul %53, %10, %cst_28 {dimension_numbers = #tpu.dot_dimension_numbers<[1], [0], [0], [1], [0, 0, 1, 1], [], []>} : vector<4x8xbf16>, vector<8x16xbf16>, vector<4x16xf32> -> vector<4x16xf32>
    %cst_29 = arith.constant dense<0.000000e+00> : vector<4x16xf32>
    %57 = tpu.matmul %55, %11, %cst_29 {dimension_numbers = #tpu.dot_dimension_numbers<[1], [0], [0], [1], [0, 0, 1, 1], [], []>} : vector<4x8xbf16>, vector<8x16xbf16>, vector<4x16xf32> -> vector<4x16xf32>
    %58 = arith.addf %56, %57 : vector<4x16xf32>
    %c0_30 = arith.constant 0 : index
    %c0_31 = arith.constant 0 : index
    %c64 = arith.constant 64 : index
    %59 = vector.load %arg13[%c0_30, %c0_31, %c64] : memref<1x4x256xf32, #tpu.memory_space<vmem>>, vector<1x4x16xf32>
    %60 = vector.shape_cast %59 : vector<1x4x16xf32> to vector<4x16xf32>
    %61 = vector.shape_cast %58 : vector<4x16xf32> to vector<1x4x16xf32>
    tpu.vector_store %arg13[%c0_30, %c0_31, %c64], %61 {strides = array<i32>} : memref<1x4x256xf32, #tpu.memory_space<vmem>>, vector<1x4x16xf32>,
    %62 = vector.extract_strided_slice %9 {offsets = [8, 16], sizes = [4, 8], strides = [1, 1]} : vector<16x64xf32> to vector<4x8xf32>
    %63 = arith.truncf %62 : vector<4x8xf32> to vector<4x8xbf16>
    %64 = vector.extract_strided_slice %9 {offsets = [12, 16], sizes = [4, 8], strides = [1, 1]} : vector<16x64xf32> to vector<4x8xf32>
    %65 = arith.truncf %64 : vector<4x8xf32> to vector<4x8xbf16>
    %cst_32 = arith.constant dense<0.000000e+00> : vector<4x16xf32>
    %66 = tpu.matmul %63, %10, %cst_32 {dimension_numbers = #tpu.dot_dimension_numbers<[1], [0], [0], [1], [0, 0, 1, 1], [], []>} : vector<4x8xbf16>, vector<8x16xbf16>, vector<4x16xf32> -> vector<4x16xf32>
    %cst_33 = arith.constant dense<0.000000e+00> : vector<4x16xf32>
    %67 = tpu.matmul %65, %11, %cst_33 {dimension_numbers = #tpu.dot_dimension_numbers<[1], [0], [0], [1], [0, 0, 1, 1], [], []>} : vector<4x8xbf16>, vector<8x16xbf16>, vector<4x16xf32> -> vector<4x16xf32>
    %68 = arith.addf %66, %67 : vector<4x16xf32>
    %c0_34 = arith.constant 0 : index
    %c0_35 = arith.constant 0 : index
    %c80 = arith.constant 80 : index
    %69 = vector.load %arg13[%c0_34, %c0_35, %c80] : memref<1x4x256xf32, #tpu.memory_space<vmem>>, vector<1x4x16xf32>
    %70 = vector.shape_cast %69 : vector<1x4x16xf32> to vector<4x16xf32>
    %71 = vector.shape_cast %68 : vector<4x16xf32> to vector<1x4x16xf32>
    tpu.vector_store %arg13[%c0_34, %c0_35, %c80], %71 {strides = array<i32>} : memref<1x4x256xf32, #tpu.memory_space<vmem>>, vector<1x4x16xf32>,
    %72 = vector.extract_strided_slice %9 {offsets = [0, 24], sizes = [4, 8], strides = [1, 1]} : vector<16x64xf32> to vector<4x8xf32>
    %73 = arith.truncf %72 : vector<4x8xf32> to vector<4x8xbf16>
    %74 = vector.extract_strided_slice %9 {offsets = [4, 24], sizes = [4, 8], strides = [1, 1]} : vector<16x64xf32> to vector<4x8xf32>
    %75 = arith.truncf %74 : vector<4x8xf32> to vector<4x8xbf16>
    %cst_36 = arith.constant dense<0.000000e+00> : vector<4x16xf32>
    %76 = tpu.matmul %73, %10, %cst_36 {dimension_numbers = #tpu.dot_dimension_numbers<[1], [0], [0], [1], [0, 0, 1, 1], [], []>} : vector<4x8xbf16>, vector<8x16xbf16>, vector<4x16xf32> -> vector<4x16xf32>
    %cst_37 = arith.constant dense<0.000000e+00> : vector<4x16xf32>
    %77 = tpu.matmul %75, %11, %cst_37 {dimension_numbers = #tpu.dot_dimension_numbers<[1], [0], [0], [1], [0, 0, 1, 1], [], []>} : vector<4x8xbf16>, vector<8x16xbf16>, vector<4x16xf32> -> vector<4x16xf32>
    %78 = arith.addf %76, %77 : vector<4x16xf32>
    %c0_38 = arith.constant 0 : index
    %c0_39 = arith.constant 0 : index
    %c96 = arith.constant 96 : index
    %79 = vector.load %arg13[%c0_38, %c0_39, %c96] : memref<1x4x256xf32, #tpu.memory_space<vmem>>, vector<1x4x16xf32>
    %80 = vector.shape_cast %79 : vector<1x4x16xf32> to vector<4x16xf32>
    %81 = vector.shape_cast %78 : vector<4x16xf32> to vector<1x4x16xf32>
    tpu.vector_store %arg13[%c0_38, %c0_39, %c96], %81 {strides = array<i32>} : memref<1x4x256xf32, #tpu.memory_space<vmem>>, vector<1x4x16xf32>,
    %82 = vector.extract_strided_slice %9 {offsets = [8, 24], sizes = [4, 8], strides = [1, 1]} : vector<16x64xf32> to vector<4x8xf32>
    %83 = arith.truncf %82 : vector<4x8xf32> to vector<4x8xbf16>
    %84 = vector.extract_strided_slice %9 {offsets = [12, 24], sizes = [4, 8], strides = [1, 1]} : vector<16x64xf32> to vector<4x8xf32>
    %85 = arith.truncf %84 : vector<4x8xf32> to vector<4x8xbf16>
    %cst_40 = arith.constant dense<0.000000e+00> : vector<4x16xf32>
    %86 = tpu.matmul %83, %10, %cst_40 {dimension_numbers = #tpu.dot_dimension_numbers<[1], [0], [0], [1], [0, 0, 1, 1], [], []>} : vector<4x8xbf16>, vector<8x16xbf16>, vector<4x16xf32> -> vector<4x16xf32>
    %cst_41 = arith.constant dense<0.000000e+00> : vector<4x16xf32>
    %87 = tpu.matmul %85, %11, %cst_41 {dimension_numbers = #tpu.dot_dimension_numbers<[1], [0], [0], [1], [0, 0, 1, 1], [], []>} : vector<4x8xbf16>, vector<8x16xbf16>, vector<4x16xf32> -> vector<4x16xf32>
    %88 = arith.addf %86, %87 : vector<4x16xf32>
    %c0_42 = arith.constant 0 : index
    %c0_43 = arith.constant 0 : index
    %c112 = arith.constant 112 : index
    %89 = vector.load %arg13[%c0_42, %c0_43, %c112] : memref<1x4x256xf32, #tpu.memory_space<vmem>>, vector<1x4x16xf32>
    %90 = vector.shape_cast %89 : vector<1x4x16xf32> to vector<4x16xf32>
    %91 = vector.shape_cast %88 : vector<4x16xf32> to vector<1x4x16xf32>
    tpu.vector_store %arg13[%c0_42, %c0_43, %c112], %91 {strides = array<i32>} : memref<1x4x256xf32, #tpu.memory_space<vmem>>, vector<1x4x16xf32>,
    %92 = vector.extract_strided_slice %9 {offsets = [0, 32], sizes = [4, 8], strides = [1, 1]} : vector<16x64xf32> to vector<4x8xf32>
    %93 = arith.truncf %92 : vector<4x8xf32> to vector<4x8xbf16>
    %94 = vector.extract_strided_slice %9 {offsets = [4, 32], sizes = [4, 8], strides = [1, 1]} : vector<16x64xf32> to vector<4x8xf32>
    %95 = arith.truncf %94 : vector<4x8xf32> to vector<4x8xbf16>
    %cst_44 = arith.constant dense<0.000000e+00> : vector<4x16xf32>
    %96 = tpu.matmul %93, %10, %cst_44 {dimension_numbers = #tpu.dot_dimension_numbers<[1], [0], [0], [1], [0, 0, 1, 1], [], []>} : vector<4x8xbf16>, vector<8x16xbf16>, vector<4x16xf32> -> vector<4x16xf32>
    %cst_45 = arith.constant dense<0.000000e+00> : vector<4x16xf32>
    %97 = tpu.matmul %95, %11, %cst_45 {dimension_numbers = #tpu.dot_dimension_numbers<[1], [0], [0], [1], [0, 0, 1, 1], [], []>} : vector<4x8xbf16>, vector<8x16xbf16>, vector<4x16xf32> -> vector<4x16xf32>
    %98 = arith.addf %96, %97 : vector<4x16xf32>
    %c0_46 = arith.constant 0 : index
    %c0_47 = arith.constant 0 : index
    %c128 = arith.constant 128 : index
    %99 = vector.load %arg13[%c0_46, %c0_47, %c128] : memref<1x4x256xf32, #tpu.memory_space<vmem>>, vector<1x4x16xf32>
    %100 = vector.shape_cast %99 : vector<1x4x16xf32> to vector<4x16xf32>
    %101 = vector.shape_cast %98 : vector<4x16xf32> to vector<1x4x16xf32>
    tpu.vector_store %arg13[%c0_46, %c0_47, %c128], %101 {strides = array<i32>} : memref<1x4x256xf32, #tpu.memory_space<vmem>>, vector<1x4x16xf32>,
    %102 = vector.extract_strided_slice %9 {offsets = [8, 32], sizes = [4, 8], strides = [1, 1]} : vector<16x64xf32> to vector<4x8xf32>
    %103 = arith.truncf %102 : vector<4x8xf32> to vector<4x8xbf16>
    %104 = vector.extract_strided_slice %9 {offsets = [12, 32], sizes = [4, 8], strides = [1, 1]} : vector<16x64xf32> to vector<4x8xf32>
    %105 = arith.truncf %104 : vector<4x8xf32> to vector<4x8xbf16>
    %cst_48 = arith.constant dense<0.000000e+00> : vector<4x16xf32>
    %106 = tpu.matmul %103, %10, %cst_48 {dimension_numbers = #tpu.dot_dimension_numbers<[1], [0], [0], [1], [0, 0, 1, 1], [], []>} : vector<4x8xbf16>, vector<8x16xbf16>, vector<4x16xf32> -> vector<4x16xf32>
    %cst_49 = arith.constant dense<0.000000e+00> : vector<4x16xf32>
    %107 = tpu.matmul %105, %11, %cst_49 {dimension_numbers = #tpu.dot_dimension_numbers<[1], [0], [0], [1], [0, 0, 1, 1], [], []>} : vector<4x8xbf16>, vector<8x16xbf16>, vector<4x16xf32> -> vector<4x16xf32>
    %108 = arith.addf %106, %107 : vector<4x16xf32>
    %c0_50 = arith.constant 0 : index
    %c0_51 = arith.constant 0 : index
    %c144 = arith.constant 144 : index
    %109 = vector.load %arg13[%c0_50, %c0_51, %c144] : memref<1x4x256xf32, #tpu.memory_space<vmem>>, vector<1x4x16xf32>
    %110 = vector.shape_cast %109 : vector<1x4x16xf32> to vector<4x16xf32>
    %111 = vector.shape_cast %108 : vector<4x16xf32> to vector<1x4x16xf32>
    tpu.vector_store %arg13[%c0_50, %c0_51, %c144], %111 {strides = array<i32>} : memref<1x4x256xf32, #tpu.memory_space<vmem>>, vector<1x4x16xf32>,
    %112 = vector.extract_strided_slice %9 {offsets = [0, 40], sizes = [4, 8], strides = [1, 1]} : vector<16x64xf32> to vector<4x8xf32>
    %113 = arith.truncf %112 : vector<4x8xf32> to vector<4x8xbf16>
    %114 = vector.extract_strided_slice %9 {offsets = [4, 40], sizes = [4, 8], strides = [1, 1]} : vector<16x64xf32> to vector<4x8xf32>
    %115 = arith.truncf %114 : vector<4x8xf32> to vector<4x8xbf16>
    %cst_52 = arith.constant dense<0.000000e+00> : vector<4x16xf32>
    %116 = tpu.matmul %113, %10, %cst_52 {dimension_numbers = #tpu.dot_dimension_numbers<[1], [0], [0], [1], [0, 0, 1, 1], [], []>} : vector<4x8xbf16>, vector<8x16xbf16>, vector<4x16xf32> -> vector<4x16xf32>
    %cst_53 = arith.constant dense<0.000000e+00> : vector<4x16xf32>
    %117 = tpu.matmul %115, %11, %cst_53 {dimension_numbers = #tpu.dot_dimension_numbers<[1], [0], [0], [1], [0, 0, 1, 1], [], []>} : vector<4x8xbf16>, vector<8x16xbf16>, vector<4x16xf32> -> vector<4x16xf32>
    %118 = arith.addf %116, %117 : vector<4x16xf32>
    %c0_54 = arith.constant 0 : index
    %c0_55 = arith.constant 0 : index
    %c160 = arith.constant 160 : index
    %119 = vector.load %arg13[%c0_54, %c0_55, %c160] : memref<1x4x256xf32, #tpu.memory_space<vmem>>, vector<1x4x16xf32>
    %120 = vector.shape_cast %119 : vector<1x4x16xf32> to vector<4x16xf32>
    %121 = vector.shape_cast %118 : vector<4x16xf32> to vector<1x4x16xf32>
    tpu.vector_store %arg13[%c0_54, %c0_55, %c160], %121 {strides = array<i32>} : memref<1x4x256xf32, #tpu.memory_space<vmem>>, vector<1x4x16xf32>,
    %122 = vector.extract_strided_slice %9 {offsets = [8, 40], sizes = [4, 8], strides = [1, 1]} : vector<16x64xf32> to vector<4x8xf32>
    %123 = arith.truncf %122 : vector<4x8xf32> to vector<4x8xbf16>
    %124 = vector.extract_strided_slice %9 {offsets = [12, 40], sizes = [4, 8], strides = [1, 1]} : vector<16x64xf32> to vector<4x8xf32>
    %125 = arith.truncf %124 : vector<4x8xf32> to vector<4x8xbf16>
    %cst_56 = arith.constant dense<0.000000e+00> : vector<4x16xf32>
    %126 = tpu.matmul %123, %10, %cst_56 {dimension_numbers = #tpu.dot_dimension_numbers<[1], [0], [0], [1], [0, 0, 1, 1], [], []>} : vector<4x8xbf16>, vector<8x16xbf16>, vector<4x16xf32> -> vector<4x16xf32>
    %cst_57 = arith.constant dense<0.000000e+00> : vector<4x16xf32>
    %127 = tpu.matmul %125, %11, %cst_57 {dimension_numbers = #tpu.dot_dimension_numbers<[1], [0], [0], [1], [0, 0, 1, 1], [], []>} : vector<4x8xbf16>, vector<8x16xbf16>, vector<4x16xf32> -> vector<4x16xf32>
    %128 = arith.addf %126, %127 : vector<4x16xf32>
    %c0_58 = arith.constant 0 : index
    %c0_59 = arith.constant 0 : index
    %c176 = arith.constant 176 : index
    %129 = vector.load %arg13[%c0_58, %c0_59, %c176] : memref<1x4x256xf32, #tpu.memory_space<vmem>>, vector<1x4x16xf32>
    %130 = vector.shape_cast %129 : vector<1x4x16xf32> to vector<4x16xf32>
    %131 = vector.shape_cast %128 : vector<4x16xf32> to vector<1x4x16xf32>
    tpu.vector_store %arg13[%c0_58, %c0_59, %c176], %131 {strides = array<i32>} : memref<1x4x256xf32, #tpu.memory_space<vmem>>, vector<1x4x16xf32>,
    %132 = vector.extract_strided_slice %9 {offsets = [0, 48], sizes = [4, 8], strides = [1, 1]} : vector<16x64xf32> to vector<4x8xf32>
    %133 = arith.truncf %132 : vector<4x8xf32> to vector<4x8xbf16>
    %134 = vector.extract_strided_slice %9 {offsets = [4, 48], sizes = [4, 8], strides = [1, 1]} : vector<16x64xf32> to vector<4x8xf32>
    %135 = arith.truncf %134 : vector<4x8xf32> to vector<4x8xbf16>
    %cst_60 = arith.constant dense<0.000000e+00> : vector<4x16xf32>
    %136 = tpu.matmul %133, %10, %cst_60 {dimension_numbers = #tpu.dot_dimension_numbers<[1], [0], [0], [1], [0, 0, 1, 1], [], []>} : vector<4x8xbf16>, vector<8x16xbf16>, vector<4x16xf32> -> vector<4x16xf32>
    %cst_61 = arith.constant dense<0.000000e+00> : vector<4x16xf32>
    %137 = tpu.matmul %135, %11, %cst_61 {dimension_numbers = #tpu.dot_dimension_numbers<[1], [0], [0], [1], [0, 0, 1, 1], [], []>} : vector<4x8xbf16>, vector<8x16xbf16>, vector<4x16xf32> -> vector<4x16xf32>
    %138 = arith.addf %136, %137 : vector<4x16xf32>
    %c0_62 = arith.constant 0 : index
    %c0_63 = arith.constant 0 : index
    %c192 = arith.constant 192 : index
    %139 = vector.load %arg13[%c0_62, %c0_63, %c192] : memref<1x4x256xf32, #tpu.memory_space<vmem>>, vector<1x4x16xf32>
    %140 = vector.shape_cast %139 : vector<1x4x16xf32> to vector<4x16xf32>
    %141 = vector.shape_cast %138 : vector<4x16xf32> to vector<1x4x16xf32>
    tpu.vector_store %arg13[%c0_62, %c0_63, %c192], %141 {strides = array<i32>} : memref<1x4x256xf32, #tpu.memory_space<vmem>>, vector<1x4x16xf32>,
    %142 = vector.extract_strided_slice %9 {offsets = [8, 48], sizes = [4, 8], strides = [1, 1]} : vector<16x64xf32> to vector<4x8xf32>
    %143 = arith.truncf %142 : vector<4x8xf32> to vector<4x8xbf16>
    %144 = vector.extract_strided_slice %9 {offsets = [12, 48], sizes = [4, 8], strides = [1, 1]} : vector<16x64xf32> to vector<4x8xf32>
    %145 = arith.truncf %144 : vector<4x8xf32> to vector<4x8xbf16>
    %cst_64 = arith.constant dense<0.000000e+00> : vector<4x16xf32>
    %146 = tpu.matmul %143, %10, %cst_64 {dimension_numbers = #tpu.dot_dimension_numbers<[1], [0], [0], [1], [0, 0, 1, 1], [], []>} : vector<4x8xbf16>, vector<8x16xbf16>, vector<4x16xf32> -> vector<4x16xf32>
    %cst_65 = arith.constant dense<0.000000e+00> : vector<4x16xf32>
    %147 = tpu.matmul %145, %11, %cst_65 {dimension_numbers = #tpu.dot_dimension_numbers<[1], [0], [0], [1], [0, 0, 1, 1], [], []>} : vector<4x8xbf16>, vector<8x16xbf16>, vector<4x16xf32> -> vector<4x16xf32>
    %148 = arith.addf %146, %147 : vector<4x16xf32>
    %c0_66 = arith.constant 0 : index
    %c0_67 = arith.constant 0 : index
    %c208 = arith.constant 208 : index
    %149 = vector.load %arg13[%c0_66, %c0_67, %c208] : memref<1x4x256xf32, #tpu.memory_space<vmem>>, vector<1x4x16xf32>
    %150 = vector.shape_cast %149 : vector<1x4x16xf32> to vector<4x16xf32>
    %151 = vector.shape_cast %148 : vector<4x16xf32> to vector<1x4x16xf32>
    tpu.vector_store %arg13[%c0_66, %c0_67, %c208], %151 {strides = array<i32>} : memref<1x4x256xf32, #tpu.memory_space<vmem>>, vector<1x4x16xf32>,
    %152 = vector.extract_strided_slice %9 {offsets = [0, 56], sizes = [4, 8], strides = [1, 1]} : vector<16x64xf32> to vector<4x8xf32>
    %153 = arith.truncf %152 : vector<4x8xf32> to vector<4x8xbf16>
    %154 = vector.extract_strided_slice %9 {offsets = [4, 56], sizes = [4, 8], strides = [1, 1]} : vector<16x64xf32> to vector<4x8xf32>
    %155 = arith.truncf %154 : vector<4x8xf32> to vector<4x8xbf16>
    %cst_68 = arith.constant dense<0.000000e+00> : vector<4x16xf32>
    %156 = tpu.matmul %153, %10, %cst_68 {dimension_numbers = #tpu.dot_dimension_numbers<[1], [0], [0], [1], [0, 0, 1, 1], [], []>} : vector<4x8xbf16>, vector<8x16xbf16>, vector<4x16xf32> -> vector<4x16xf32>
    %cst_69 = arith.constant dense<0.000000e+00> : vector<4x16xf32>
    %157 = tpu.matmul %155, %11, %cst_69 {dimension_numbers = #tpu.dot_dimension_numbers<[1], [0], [0], [1], [0, 0, 1, 1], [], []>} : vector<4x8xbf16>, vector<8x16xbf16>, vector<4x16xf32> -> vector<4x16xf32>
    %158 = arith.addf %156, %157 : vector<4x16xf32>
    %c0_70 = arith.constant 0 : index
    %c0_71 = arith.constant 0 : index
    %c224 = arith.constant 224 : index
    %159 = vector.load %arg13[%c0_70, %c0_71, %c224] : memref<1x4x256xf32, #tpu.memory_space<vmem>>, vector<1x4x16xf32>
    %160 = vector.shape_cast %159 : vector<1x4x16xf32> to vector<4x16xf32>
    %161 = vector.shape_cast %158 : vector<4x16xf32> to vector<1x4x16xf32>
    tpu.vector_store %arg13[%c0_70, %c0_71, %c224], %161 {strides = array<i32>} : memref<1x4x256xf32, #tpu.memory_space<vmem>>, vector<1x4x16xf32>,
    %162 = vector.extract_strided_slice %9 {offsets = [8, 56], sizes = [4, 8], strides = [1, 1]} : vector<16x64xf32> to vector<4x8xf32>
    %163 = arith.truncf %162 : vector<4x8xf32> to vector<4x8xbf16>
    %164 = vector.extract_strided_slice %9 {offsets = [12, 56], sizes = [4, 8], strides = [1, 1]} : vector<16x64xf32> to vector<4x8xf32>
    %165 = arith.truncf %164 : vector<4x8xf32> to vector<4x8xbf16>
    %cst_72 = arith.constant dense<0.000000e+00> : vector<4x16xf32>
    %166 = tpu.matmul %163, %10, %cst_72 {dimension_numbers = #tpu.dot_dimension_numbers<[1], [0], [0], [1], [0, 0, 1, 1], [], []>} : vector<4x8xbf16>, vector<8x16xbf16>, vector<4x16xf32> -> vector<4x16xf32>
    %cst_73 = arith.constant dense<0.000000e+00> : vector<4x16xf32>
    %167 = tpu.matmul %165, %11, %cst_73 {dimension_numbers = #tpu.dot_dimension_numbers<[1], [0], [0], [1], [0, 0, 1, 1], [], []>} : vector<4x8xbf16>, vector<8x16xbf16>, vector<4x16xf32> -> vector<4x16xf32>
    %168 = arith.addf %166, %167 : vector<4x16xf32>
    %c0_74 = arith.constant 0 : index
    %c0_75 = arith.constant 0 : index
    %c240 = arith.constant 240 : index
    %169 = vector.load %arg13[%c0_74, %c0_75, %c240] : memref<1x4x256xf32, #tpu.memory_space<vmem>>, vector<1x4x16xf32>
    %170 = vector.shape_cast %169 : vector<1x4x16xf32> to vector<4x16xf32>
    %171 = vector.shape_cast %168 : vector<4x16xf32> to vector<1x4x16xf32>
    tpu.vector_store %arg13[%c0_74, %c0_75, %c240], %171 {strides = array<i32>} : memref<1x4x256xf32, #tpu.memory_space<vmem>>, vector<1x4x16xf32>,
    %c0_76 = arith.constant 0 : index
    %c0_77 = arith.constant 0 : index
    %c0_78 = arith.constant 0 : index
    %172 = vector.load %arg13[%c0_76, %c0_77, %c0_78] : memref<1x4x256xf32, #tpu.memory_space<vmem>>, vector<1x4x256xf32>
    %173 = vector.shape_cast %172 : vector<1x4x256xf32> to vector<4x256xf32>
    %c0_79 = arith.constant 0 : index
    %c0_80 = arith.constant 0 : index
    %174 = vector.load %arg8[%c0_79, %c0_80] : memref<4x4xbf16, #tpu.memory_space<vmem>>, vector<4x4xbf16>
    %c0_81 = arith.constant 0 : index
    %c0_82 = arith.constant 0 : index
    %c0_83 = arith.constant 0 : index
    %175 = vector.load %arg3[%c0_81, %c0_82, %c0_83] : memref<1x4x256xf32, #tpu.memory_space<vmem>>, vector<1x4x256xf32>
    %176 = vector.shape_cast %175 : vector<1x4x256xf32> to vector<4x256xf32>
    %177 = arith.truncf %176 : vector<4x256xf32> to vector<4x256xbf16>
    %cst_84 = arith.constant dense<0.000000e+00> : vector<4x256xf32>
    %178 = tpu.matmul %174, %177, %cst_84 {dimension_numbers = #tpu.dot_dimension_numbers<[1], [0], [0], [1], [0, 0, 1, 1], [], []>} : vector<4x4xbf16>, vector<4x256xbf16>, vector<4x256xf32> -> vector<4x256xf32>
    %c0_85 = arith.constant 0 : index
    %c0_86 = arith.constant 0 : index
    %179 = vector.load %arg9[%c0_85, %c0_86] : memref<4x4xbf16, #tpu.memory_space<vmem>>, vector<4x4xbf16>
    %180 = arith.truncf %173 : vector<4x256xf32> to vector<4x256xbf16>
    %cst_87 = arith.constant dense<0.000000e+00> : vector<4x256xf32>
    %181 = tpu.matmul %179, %180, %cst_87 {dimension_numbers = #tpu.dot_dimension_numbers<[1], [0], [0], [1], [0, 0, 1, 1], [], []>} : vector<4x4xbf16>, vector<4x256xbf16>, vector<4x256xf32> -> vector<4x256xf32>
    %182 = arith.addf %178, %181 : vector<4x256xf32>
    %c0_88 = arith.constant 0 : index
    %c0_89 = arith.constant 0 : index
    %183 = vector.load %arg10[%c0_88, %c0_89] : memref<4x1xf32, #tpu.memory_space<vmem>>, vector<4x1xf32>
    %184 = vector.broadcast %183 : vector<4x1xf32> to vector<4x256xf32>
    %185 = arith.addf %182, %184 : vector<4x256xf32>
    %cst_90 = arith.constant 0.000000e+00 : f32
    %186 = vector.broadcast %cst_90 : f32 to vector<4x256xf32>
    %187 = arith.maximumf %185, %186 : vector<4x256xf32>
    %c0_91 = arith.constant 0 : index
    %c0_92 = arith.constant 0 : index
    %188 = vector.load %arg11[%c0_91, %c0_92] : memref<1x4xbf16, #tpu.memory_space<vmem>>, vector<1x4xbf16>
    %189 = arith.truncf %187 : vector<4x256xf32> to vector<4x256xbf16>
    %cst_93 = arith.constant dense<0.000000e+00> : vector<1x256xf32>
    %190 = tpu.matmul %188, %189, %cst_93 {dimension_numbers = #tpu.dot_dimension_numbers<[1], [0], [0], [1], [0, 0, 1, 1], [], []>} : vector<1x4xbf16>, vector<4x256xbf16>, vector<1x256xf32> -> vector<1x256xf32>
    %c0_94 = arith.constant 0 : index
    %191 = memref.load %arg12[%c0_94] : memref<1xf32, #tpu.memory_space<smem>>
    %192 = vector.broadcast %191 : f32 to vector<1x256xf32>
    %193 = arith.addf %190, %192 : vector<1x256xf32>
    %194 = arith.negf %193 : vector<1x256xf32>
    %195 = math.exp %194 : vector<1x256xf32>
    %cst_95 = arith.constant 1.000000e+00 : f32
    %196 = vector.broadcast %cst_95 : f32 to vector<1x256xf32>
    %197 = arith.addf %196, %195 : vector<1x256xf32>
    %198 = arith.divf %196, %197 : vector<1x256xf32>
    %199 = vector.broadcast %198 : vector<1x256xf32> to vector<4x256xf32>
    %200 = arith.mulf %173, %199 : vector<4x256xf32>
    %c0_96 = arith.constant 0 : index
    %c0_97 = arith.constant 0 : index
    %c0_98 = arith.constant 0 : index
    %201 = vector.load %arg13[%c0_96, %c0_97, %c0_98] : memref<1x4x256xf32, #tpu.memory_space<vmem>>, vector<1x4x256xf32>
    %202 = vector.shape_cast %201 : vector<1x4x256xf32> to vector<4x256xf32>
    %203 = vector.shape_cast %200 : vector<4x256xf32> to vector<1x4x256xf32>
    tpu.vector_store %arg13[%c0_96, %c0_97, %c0_98], %203 {strides = array<i32>} : memref<1x4x256xf32, #tpu.memory_space<vmem>>, vector<1x4x256xf32>,
    return
  }
  func.func @transform_0(%arg0: i32, %arg1: i32) -> (i32, i32, i32) {
    %c0_i32 = arith.constant 0 : i32
    %c0_i32_0 = arith.constant 0 : i32
    return %arg0, %c0_i32, %arg1 : i32, i32, i32
  }
  func.func @transform_1(%arg0: i32, %arg1: i32) -> (i32, i32, i32) {
    %c0_i32 = arith.constant 0 : i32
    %c0_i32_0 = arith.constant 0 : i32
    return %arg0, %c0_i32, %arg1 : i32, i32, i32
  }
  func.func @transform_2(%arg0: i32, %arg1: i32) -> (i32, i32) {
    %c0_i32 = arith.constant 0 : i32
    %c0_i32_0 = arith.constant 0 : i32
    %c0_i32_1 = arith.constant 0 : i32
    return %c0_i32, %c0_i32_0 : i32, i32
  }
  func.func @transform_3(%arg0: i32, %arg1: i32) -> (i32, i32) {
    %c0_i32 = arith.constant 0 : i32
    %c0_i32_0 = arith.constant 0 : i32
    %c0_i32_1 = arith.constant 0 : i32
    return %c0_i32, %c0_i32_0 : i32, i32
  }
  func.func @transform_4(%arg0: i32, %arg1: i32) -> (i32, i32) {
    %c0_i32 = arith.constant 0 : i32
    %c0_i32_0 = arith.constant 0 : i32
    %c0_i32_1 = arith.constant 0 : i32
    return %c0_i32, %c0_i32_0 : i32, i32
  }
  func.func @transform_5(%arg0: i32, %arg1: i32) -> (i32, i32) {
    %c0_i32 = arith.constant 0 : i32
    %c0_i32_0 = arith.constant 0 : i32
    %c0_i32_1 = arith.constant 0 : i32
    return %c0_i32, %c0_i32_0 : i32, i32
  }
  func.func @transform_6(%arg0: i32, %arg1: i32) -> (i32, i32) {
    %c0_i32 = arith.constant 0 : i32
    %c0_i32_0 = arith.constant 0 : i32
    %c0_i32_1 = arith.constant 0 : i32
    return %c0_i32, %c0_i32_0 : i32, i32
  }
  func.func @transform_7(%arg0: i32, %arg1: i32) -> (i32, i32) {
    %c0_i32 = arith.constant 0 : i32
    %c0_i32_0 = arith.constant 0 : i32
    %c0_i32_1 = arith.constant 0 : i32
    return %c0_i32, %c0_i32_0 : i32, i32
  }
  func.func @transform_8(%arg0: i32, %arg1: i32) -> (i32, i32) {
    %c0_i32 = arith.constant 0 : i32
    %c0_i32_0 = arith.constant 0 : i32
    %c0_i32_1 = arith.constant 0 : i32
    return %c0_i32, %c0_i32_0 : i32, i32
  }
  func.func @transform_9(%arg0: i32, %arg1: i32) -> (i32, i32) {
    %c0_i32 = arith.constant 0 : i32
    %c0_i32_0 = arith.constant 0 : i32
    %c0_i32_1 = arith.constant 0 : i32
    return %c0_i32, %c0_i32_0 : i32, i32
  }
  func.func @transform_10(%arg0: i32, %arg1: i32) -> i32 {
    %c0_i32 = arith.constant 0 : i32
    %c0_i32_0 = arith.constant 0 : i32
    return %c0_i32 : i32
  }
  func.func @transform_11(%arg0: i32, %arg1: i32) -> (i32, i32, i32) {
    %c0_i32 = arith.constant 0 : i32
    %c0_i32_0 = arith.constant 0 : i32
    return %arg0, %c0_i32, %arg1 : i32, i32, i32
  }
}

</mosaic_0001>

<llo_original>
// kernel: unet_block_attention_pallas.1
$region0: #{unet_block_attention_pallas.1}
  #allocation0 [shape = 'u32[]', space=smem, size = 0x4, offset = 0x4, fixed_abs, tag = 'smem constant byte address 0x4 - core index']
  #allocation1 [shape = 'u32[72,128]{1,0:T(1,128)}', space=vmem, size = 0x9000, scoped, tag = 'internal scratch']
  #allocation2 [shape = 'f32[1]{0:T(128)S(6)}', space=smem, size = 0x200, scoped, tag = 'scoped memory for unet_block_attention_pallas.1']
  %s0 = inlined_call_operand.vmem [shape: f32[2,8,64], index: 0, kind: input, shape index: {}]
  %s1 = inlined_call_operand.vmem [shape: f32[2,4,256], index: 1, kind: input, shape index: {}]
  %s2 = inlined_call_operand.vmem [shape: bf16[16,8], index: 2, kind: input, shape index: {}]
  %s3 = inlined_call_operand.vmem [shape: f32[16,1], index: 3, kind: input, shape index: {}]
  %s4 = inlined_call_operand.vmem [shape: bf16[8,16], index: 4, kind: input, shape index: {}]
  %s5 = inlined_call_operand.vmem [shape: bf16[8,16], index: 5, kind: input, shape index: {}]
  %s6 = inlined_call_operand.vmem [shape: bf16[4,4], index: 6, kind: input, shape index: {}]
  %s7 = inlined_call_operand.vmem [shape: bf16[4,4], index: 7, kind: input, shape index: {}]
  %s8 = inlined_call_operand.vmem [shape: f32[4,1], index: 8, kind: input, shape index: {}]
  %s9 = inlined_call_operand.vmem [shape: bf16[1,4], index: 9, kind: input, shape index: {}]
  %s10 = inlined_call_operand.<no memory space> [shape: f32[1], index: 10, kind: input, shape index: {}]
  %s11 = inlined_call_operand.vmem [shape: f32[2,4,256], index: 11, kind: output, shape index: {}]
  %s12 = sld [smem:[#allocation0]]
  $region77: #{unet_block_attention_pallas.1} parent=0
    _
  %s14 = ssub.s32 1, %s12
  %s15 = scalar_select 0, %s14, %s12
  %16 = sst [smem:[#allocation2]] %s10
  loop: start=0, step=1, limit=4
  $region2: #{unet_block_attention_pallas.1} parent=0 // loop_pre_header
    _
  $region3: #{unet_block_attention_pallas.1} parent=0 // loop_header
    %s18 = sphi 0, %s22
    %p19 = scmp.ge.s32.totalorder %s18, 4
    %s25 = sphi 0, %s37
    %s26 = sphi 0, %s33
    %s27 = sphi 0, %s25
    %s28 = sphi 0, %s26
    %s29 = sphi 0, %s27
    %s30 = sphi 0, %s28
    %s42 = sphi 0, %s44
    %s45 = sphi 0, %s42
    %s46 = sphi 0, %s45
    %s62 = sphi 0, %s46
    %s70 = sphi 0, %s72
    %s73 = sphi 0, %s70
    %s74 = sphi 0, %s73
    %s90 = sphi 0, %s74
    %s94 = sphi 0, %s94
    %s96 = sphi 0, %s94
    %s97 = sphi 0, %s96
    %s111 = sphi 0, %s97
    %s115 = sphi 0, %s115
    %s117 = sphi 0, %s115
    %s118 = sphi 0, %s117
    %s132 = sphi 0, %s118
    %s136 = sphi 0, %s136
    %s138 = sphi 0, %s136
    %s139 = sphi 0, %s138
    %s153 = sphi 0, %s139
    %s157 = sphi 0, %s157
    %s159 = sphi 0, %s157
    %s160 = sphi 0, %s159
    %s174 = sphi 0, %s160
    %s178 = sphi 0, %s178
    %s180 = sphi 0, %s178
    %s181 = sphi 0, %s180
    %s195 = sphi 0, %s181
    %s199 = sphi 0, %s199
    %s201 = sphi 0, %s199
    %s202 = sphi 0, %s201
    %s216 = sphi 0, %s202
    %s220 = sphi 0, %s220
    %s222 = sphi 0, %s220
    %s223 = sphi 0, %s222
    %s237 = sphi 0, %s223
    %s241 = sphi 0, %s241
    %s243 = sphi 0, %s241
    %s244 = sphi 0, %s243
    %s258 = sphi 0, %s244
    %s262 = sphi 0, %s262
    %s264 = sphi 0, %s262
    %s265 = sphi 0, %s264
    %s279 = sphi 0, %s265
    %s287 = sphi 0, %s289
    %s290 = sphi 0, %s287
    %s291 = sphi 0, %s290
    %s307 = sphi 0, %s291
  $region4: #{unet_block_attention_pallas.1} parent=0 // loop_header_branch
    %21 = sbr.rel (%p19) target = $region8
  $region5: #{unet_block_attention_pallas.1} parent=0 // loop_body
    %s23 = ssub.s32 %s18, 1
    %s24 = ssub.s32 %s18, 2
    %s31 = sadd.s32 1, %s26
    %p32 = scmp.ge.s32.totalorder %s31, 1
    %s33 = scalar_select %p32, 0, %s31
    %s34 = sadd.s32 1, %s25
    %s35 = scalar_select %p32, %s34, %s25
    %p36 = scmp.ge.s32.totalorder %s35, 2
    %s37 = scalar_select %p36, 0, %s35
    %s38 = ssub.s32 %s25, %s37
    %s39 = ssub.s32 %s26, %s33
    %s40 = sor.u32 %s38, %s39
    %p41 = scmp.eq.s32.totalorder %s40, 0
    %s43 = sadd.s32 %s42, 1
    %s44 = scalar_select %p41, %s42, %s43
    %p47 = pneg %p41
    %p48 = scmp.eq.s32.totalorder %s18, 1
    %p49 = por %p47, %p48
    %p50 = scmp.ne.s32.totalorder %s42, %s45
    %p51 = scmp.eq.s32.totalorder %s18, 0
    %p52 = por %p50, %p51
    %p53 = scmp.ne.s32.totalorder %s42, %s45
    %p54 = scmp.eq.s32.totalorder %s23, 1
    %p55 = por %p53, %p54
    %p56 = scmp.ne.s32.totalorder %s45, %s46
    %p57 = scmp.eq.s32.totalorder %s23, 0
    %p58 = por %p56, %p57
    %p59 = scmp.ne.s32.totalorder %s45, %s46
    %p60 = scmp.eq.s32.totalorder %s24, 1
    %p61 = por %p59, %p60
    %p63 = scmp.ne.s32.totalorder %s46, %s62
    %p64 = scmp.eq.s32.totalorder %s24, 0
    %p65 = por %p63, %p64
    %s66 = ssub.s32 %s25, %s37
    %s67 = ssub.s32 %s26, %s33
    %s68 = sor.u32 %s66, %s67
    %p69 = scmp.eq.s32.totalorder %s68, 0
    %s71 = sadd.s32 %s70, 1
    %s72 = scalar_select %p69, %s70, %s71
    %p75 = pneg %p69
    %p76 = scmp.eq.s32.totalorder %s18, 1
    %p77 = por %p75, %p76
    %p78 = scmp.ne.s32.totalorder %s70, %s73
    %p79 = scmp.eq.s32.totalorder %s18, 0
    %p80 = por %p78, %p79
    %p81 = scmp.ne.s32.totalorder %s70, %s73
    %p82 = scmp.eq.s32.totalorder %s23, 1
    %p83 = por %p81, %p82
    %p84 = scmp.ne.s32.totalorder %s73, %s74
    %p85 = scmp.eq.s32.totalorder %s23, 0
    %p86 = por %p84, %p85
    %p87 = scmp.ne.s32.totalorder %s73, %s74
    %p88 = scmp.eq.s32.totalorder %s24, 1
    %p89 = por %p87, %p88
    %p91 = scmp.ne.s32.totalorder %s74, %s90
    %p92 = scmp.eq.s32.totalorder %s24, 0
    %p93 = por %p91, %p92
    %s95 = sadd.s32 %s94, 1
    %p98 = scmp.eq.s32.totalorder %s18, 1
    %p99 = scmp.ne.s32.totalorder %s94, %s96
    %p100 = scmp.eq.s32.totalorder %s18, 0
    %p101 = por %p99, %p100
    %p102 = scmp.ne.s32.totalorder %s94, %s96
    %p103 = scmp.eq.s32.totalorder %s23, 1
    %p104 = por %p102, %p103
    %p105 = scmp.ne.s32.totalorder %s96, %s97
    %p106 = scmp.eq.s32.totalorder %s23, 0
    %p107 = por %p105, %p106
    %p108 = scmp.ne.s32.totalorder %s96, %s97
    %p109 = scmp.eq.s32.totalorder %s24, 1
    %p110 = por %p108, %p109
    %p112 = scmp.ne.s32.totalorder %s97, %s111
    %p113 = scmp.eq.s32.totalorder %s24, 0
    %p114 = por %p112, %p113
    %s116 = sadd.s32 %s115, 1
    %p119 = scmp.eq.s32.totalorder %s18, 1
    %p120 = scmp.ne.s32.totalorder %s115, %s117
    %p121 = scmp.eq.s32.totalorder %s18, 0
    %p122 = por %p120, %p121
    %p123 = scmp.ne.s32.totalorder %s115, %s117
    %p124 = scmp.eq.s32.totalorder %s23, 1
    %p125 = por %p123, %p124
    %p126 = scmp.ne.s32.totalorder %s117, %s118
    %p127 = scmp.eq.s32.totalorder %s23, 0
    %p128 = por %p126, %p127
    %p129 = scmp.ne.s32.totalorder %s117, %s118
    %p130 = scmp.eq.s32.totalorder %s24, 1
    %p131 = por %p129, %p130
    %p133 = scmp.ne.s32.totalorder %s118, %s132
    %p134 = scmp.eq.s32.totalorder %s24, 0
    %p135 = por %p133, %p134
    %s137 = sadd.s32 %s136, 1
    %p140 = scmp.eq.s32.totalorder %s18, 1
    %p141 = scmp.ne.s32.totalorder %s136, %s138
    %p142 = scmp.eq.s32.totalorder %s18, 0
    %p143 = por %p141, %p142
    %p144 = scmp.ne.s32.totalorder %s136, %s138
    %p145 = scmp.eq.s32.totalorder %s23, 1
    %p146 = por %p144, %p145
    %p147 = scmp.ne.s32.totalorder %s138, %s139
    %p148 = scmp.eq.s32.totalorder %s23, 0
    %p149 = por %p147, %p148
    %p150 = scmp.ne.s32.totalorder %s138, %s139
    %p151 = scmp.eq.s32.totalorder %s24, 1
    %p152 = por %p150, %p151
    %p154 = scmp.ne.s32.totalorder %s139, %s153
    %p155 = scmp.eq.s32.totalorder %s24, 0
    %p156 = por %p154, %p155
    %s158 = sadd.s32 %s157, 1
    %p161 = scmp.eq.s32.totalorder %s18, 1
    %p162 = scmp.ne.s32.totalorder %s157, %s159
    %p163 = scmp.eq.s32.totalorder %s18, 0
    %p164 = por %p162, %p163
    %p165 = scmp.ne.s32.totalorder %s157, %s159
    %p166 = scmp.eq.s32.totalorder %s23, 1
    %p167 = por %p165, %p166
    %p168 = scmp.ne.s32.totalorder %s159, %s160
    %p169 = scmp.eq.s32.totalorder %s23, 0
    %p170 = por %p168, %p169
    %p171 = scmp.ne.s32.totalorder %s159, %s160
    %p172 = scmp.eq.s32.totalorder %s24, 1
    %p173 = por %p171, %p172
    %p175 = scmp.ne.s32.totalorder %s160, %s174
    %p176 = scmp.eq.s32.totalorder %s24, 0
    %p177 = por %p175, %p176
    %s179 = sadd.s32 %s178, 1
    %p182 = scmp.eq.s32.totalorder %s18, 1
    %p183 = scmp.ne.s32.totalorder %s178, %s180
    %p184 = scmp.eq.s32.totalorder %s18, 0
    %p185 = por %p183, %p184
    %p186 = scmp.ne.s32.totalorder %s178, %s180
    %p187 = scmp.eq.s32.totalorder %s23, 1
    %p188 = por %p186, %p187
    %p189 = scmp.ne.s32.totalorder %s180, %s181
    %p190 = scmp.eq.s32.totalorder %s23, 0
    %p191 = por %p189, %p190
    %p192 = scmp.ne.s32.totalorder %s180, %s181
    %p193 = scmp.eq.s32.totalorder %s24, 1
    %p194 = por %p192, %p193
    %p196 = scmp.ne.s32.totalorder %s181, %s195
    %p197 = scmp.eq.s32.totalorder %s24, 0
    %p198 = por %p196, %p197
    %s200 = sadd.s32 %s199, 1
    %p203 = scmp.eq.s32.totalorder %s18, 1
    %p204 = scmp.ne.s32.totalorder %s199, %s201
    %p205 = scmp.eq.s32.totalorder %s18, 0
    %p206 = por %p204, %p205
    %p207 = scmp.ne.s32.totalorder %s199, %s201
    %p208 = scmp.eq.s32.totalorder %s23, 1
    %p209 = por %p207, %p208
    %p210 = scmp.ne.s32.totalorder %s201, %s202
    %p211 = scmp.eq.s32.totalorder %s23, 0
    %p212 = por %p210, %p211
    %p213 = scmp.ne.s32.totalorder %s201, %s202
    %p214 = scmp.eq.s32.totalorder %s24, 1
    %p215 = por %p213, %p214
    %p217 = scmp.ne.s32.totalorder %s202, %s216
    %p218 = scmp.eq.s32.totalorder %s24, 0
    %p219 = por %p217, %p218
    %s221 = sadd.s32 %s220, 1
    %p224 = scmp.eq.s32.totalorder %s18, 1
    %p225 = scmp.ne.s32.totalorder %s220, %s222
    %p226 = scmp.eq.s32.totalorder %s18, 0
    %p227 = por %p225, %p226
    %p228 = scmp.ne.s32.totalorder %s220, %s222
    %p229 = scmp.eq.s32.totalorder %s23, 1
    %p230 = por %p228, %p229
    %p231 = scmp.ne.s32.totalorder %s222, %s223
    %p232 = scmp.eq.s32.totalorder %s23, 0
    %p233 = por %p231, %p232
    %p234 = scmp.ne.s32.totalorder %s222, %s223
    %p235 = scmp.eq.s32.totalorder %s24, 1
    %p236 = por %p234, %p235
    %p238 = scmp.ne.s32.totalorder %s223, %s237
    %p239 = scmp.eq.s32.totalorder %s24, 0
    %p240 = por %p238, %p239
    %s242 = sadd.s32 %s241, 1
    %p245 = scmp.eq.s32.totalorder %s18, 1
    %p246 = scmp.ne.s32.totalorder %s241, %s243
    %p247 = scmp.eq.s32.totalorder %s18, 0
    %p248 = por %p246, %p247
    %p249 = scmp.ne.s32.totalorder %s241, %s243
    %p250 = scmp.eq.s32.totalorder %s23, 1
    %p251 = por %p249, %p250
    %p252 = scmp.ne.s32.totalorder %s243, %s244
    %p253 = scmp.eq.s32.totalorder %s23, 0
    %p254 = por %p252, %p253
    %p255 = scmp.ne.s32.totalorder %s243, %s244
    %p256 = scmp.eq.s32.totalorder %s24, 1
    %p257 = por %p255, %p256
    %p259 = scmp.ne.s32.totalorder %s244, %s258
    %p260 = scmp.eq.s32.totalorder %s24, 0
    %p261 = por %p259, %p260
    %s263 = sadd.s32 %s262, 1
    %p266 = scmp.eq.s32.totalorder %s18, 1
    %p267 = scmp.ne.s32.totalorder %s262, %s264
    %p268 = scmp.eq.s32.totalorder %s18, 0
    %p269 = por %p267, %p268
    %p270 = scmp.ne.s32.totalorder %s262, %s264
    %p271 = scmp.eq.s32.totalorder %s23, 1
    %p272 = por %p270, %p271
    %p273 = scmp.ne.s32.totalorder %s264, %s265
    %p274 = scmp.eq.s32.totalorder %s23, 0
    %p275 = por %p273, %p274
    %p276 = scmp.ne.s32.totalorder %s264, %s265
    %p277 = scmp.eq.s32.totalorder %s24, 1
    %p278 = por %p276, %p277
    %p280 = scmp.ne.s32.totalorder %s265, %s279
    %p281 = scmp.eq.s32.totalorder %s24, 0
    %p282 = por %p280, %p281
    %s283 = ssub.s32 %s25, %s37
    %s284 = ssub.s32 %s26, %s33
    %s285 = sor.u32 %s283, %s284
    %p286 = scmp.eq.s32.totalorder %s285, 0
    %s288 = sadd.s32 %s287, 1
    %s289 = scalar_select %p286, %s287, %s288
    %p292 = pneg %p286
    %p293 = scmp.eq.s32.totalorder %s18, 1
    %p294 = por %p292, %p293
    %p295 = scmp.ne.s32.totalorder %s287, %s290
    %p296 = scmp.eq.s32.totalorder %s18, 0
    %p297 = por %p295, %p296
    %p298 = scmp.ne.s32.totalorder %s287, %s290
    %p299 = scmp.eq.s32.totalorder %s23, 1
    %p300 = por %p298, %p299
    %p301 = scmp.ne.s32.totalorder %s290, %s291
    %p302 = scmp.eq.s32.totalorder %s23, 0
    %p303 = por %p301, %p302
    %p304 = scmp.ne.s32.totalorder %s290, %s291
    %p305 = scmp.eq.s32.totalorder %s24, 1
    %p306 = por %p304, %p305
    %p308 = scmp.ne.s32.totalorder %s291, %s307
    %p309 = scmp.eq.s32.totalorder %s24, 0
    %p310 = por %p308, %p309
    %p311 = scmp.le.s32.totalorder 1, %s18
    %p312 = scmp.lt.s32.totalorder %s18, 3
    %p313 = pnand %p311, %p312
    %p314 = pneg %p313
    // Predicated region
    $region9: #{unet_block_attention_pallas.1} parent=5 // pred_check
      _
    $region10: #{unet_block_attention_pallas.1} parent=5 // pred_check_branch
      %316 = sbr.rel (%p313) target = $region12
    $region11: #{unet_block_attention_pallas.1} parent=5 // pred_region
      %s317 = ssub.s32 %s18, 1
      // Predicated region
      $region13: #{unet_block_attention_pallas.1} parent=11 // pred_check
        %p318 = pneg %p107
      $region14: #{unet_block_attention_pallas.1} parent=11 // pred_check_branch
        %320 = sbr.rel (%p318) target = $region16
      $region15: #{unet_block_attention_pallas.1} parent=11 // pred_region
        _
      $region16: #{unet_block_attention_pallas.1} parent=11 // pred_fallthru
        _
      // Predicated region
      $region17: #{unet_block_attention_pallas.1} parent=11 // pred_check
        %p321 = pneg %p128
      $region18: #{unet_block_attention_pallas.1} parent=11 // pred_check_branch
        %323 = sbr.rel (%p321) target = $region20
      $region19: #{unet_block_attention_pallas.1} parent=11 // pred_region
        _
      $region20: #{unet_block_attention_pallas.1} parent=11 // pred_fallthru
        _
      // Predicated region
      $region21: #{unet_block_attention_pallas.1} parent=11 // pred_check
        %p324 = pneg %p149
      $region22: #{unet_block_attention_pallas.1} parent=11 // pred_check_branch
        %326 = sbr.rel (%p324) target = $region24
      $region23: #{unet_block_attention_pallas.1} parent=11 // pred_region
        _
      $region24: #{unet_block_attention_pallas.1} parent=11 // pred_fallthru
        _
      // Predicated region
      $region25: #{unet_block_attention_pallas.1} parent=11 // pred_check
        %p327 = pneg %p170
      $region26: #{unet_block_attention_pallas.1} parent=11 // pred_check_branch
        %329 = sbr.rel (%p327) target = $region28
      $region27: #{unet_block_attention_pallas.1} parent=11 // pred_region
        _
      $region28: #{unet_block_attention_pallas.1} parent=11 // pred_fallthru
        _
      // Predicated region
      $region29: #{unet_block_attention_pallas.1} parent=11 // pred_check
        %p330 = pneg %p191
      $region30: #{unet_block_attention_pallas.1} parent=11 // pred_check_branch
        %332 = sbr.rel (%p330) target = $region32
      $region31: #{unet_block_attention_pallas.1} parent=11 // pred_region
        _
      $region32: #{unet_block_attention_pallas.1} parent=11 // pred_fallthru
        _
      // Predicated region
      $region33: #{unet_block_attention_pallas.1} parent=11 // pred_check
        %p333 = pneg %p212
      $region34: #{unet_block_attention_pallas.1} parent=11 // pred_check_branch
        %335 = sbr.rel (%p333) target = $region36
      $region35: #{unet_block_attention_pallas.1} parent=11 // pred_region
        _
      $region36: #{unet_block_attention_pallas.1} parent=11 // pred_fallthru
        _
      // Predicated region
      $region37: #{unet_block_attention_pallas.1} parent=11 // pred_check
        %p336 = pneg %p233
      $region38: #{unet_block_attention_pallas.1} parent=11 // pred_check_branch
        %338 = sbr.rel (%p336) target = $region40
      $region39: #{unet_block_attention_pallas.1} parent=11 // pred_region
        _
      $region40: #{unet_block_attention_pallas.1} parent=11 // pred_fallthru
        _
      // Predicated region
      $region41: #{unet_block_attention_pallas.1} parent=11 // pred_check
        %p339 = pneg %p254
      $region42: #{unet_block_attention_pallas.1} parent=11 // pred_check_branch
        %341 = sbr.rel (%p339) target = $region44
      $region43: #{unet_block_attention_pallas.1} parent=11 // pred_region
        _
      $region44: #{unet_block_attention_pallas.1} parent=11 // pred_fallthru
        _
      // Predicated region
      $region45: #{unet_block_attention_pallas.1} parent=11 // pred_check
        %p342 = pneg %p275
      $region46: #{unet_block_attention_pallas.1} parent=11 // pred_check_branch
        %344 = sbr.rel (%p342) target = $region48
      $region47: #{unet_block_attention_pallas.1} parent=11 // pred_region
        _
      $region48: #{unet_block_attention_pallas.1} parent=11 // pred_fallthru
        _
    $region12: #{unet_block_attention_pallas.1} parent=5 // pred_fallthru
      _
    %p345 = scmp.lt.s32.totalorder %s18, 2
    // Predicated region
    $region49: #{unet_block_attention_pallas.1} parent=5 // pred_check
      %p346 = pneg %p345
    $region50: #{unet_block_attention_pallas.1} parent=5 // pred_check_branch
      %348 = sbr.rel (%p346) target = $region52
    $region51: #{unet_block_attention_pallas.1} parent=5 // pred_region
      // Predicated region
      $region53: #{unet_block_attention_pallas.1} parent=51 // pred_check
        %p349 = pneg %p52
      $region54: #{unet_block_attention_pallas.1} parent=51 // pred_check_branch
        %351 = sbr.rel (%p349) target = $region56
      $region55: #{unet_block_attention_pallas.1} parent=51 // pred_region
        %p352 = scmp.lt.s32.totalorder %s25, 1
        %s353 = scalar_select %p352, %s25, 1
        %p354 = scmp.lt.s32.totalorder %s26, 0
        %s355 = scalar_select %p354, %s26, 0
        %s356 = sadd.s32 %s355, %s353
        %s357 = smul.addr %s356, 8
        %s358 = scalar_lea.vmem %s0, %s357
      $region56: #{unet_block_attention_pallas.1} parent=51 // pred_fallthru
        _
      // Predicated region
      $region57: #{unet_block_attention_pallas.1} parent=51 // pred_check
        %p359 = pneg %p80
      $region58: #{unet_block_attention_pallas.1} parent=51 // pred_check_branch
        %361 = sbr.rel (%p359) target = $region60
      $region59: #{unet_block_attention_pallas.1} parent=51 // pred_region
        %s362 = smul.u32 2, %s26
        %p363 = scmp.lt.s32.totalorder %s25, 1
        %s364 = scalar_select %p363, %s25, 1
        %p365 = scmp.lt.s32.totalorder %s362, 1
        %s366 = scalar_select %p365, %s362, 1
        %s367 = smul.addr %s364, 2
        %s368 = sadd.s32 %s366, %s367
        %s369 = smul.addr %s368, 4
        %s370 = scalar_lea.vmem %s1, %s369
        %s371 = smul.u32 2, %s26
      $region60: #{unet_block_attention_pallas.1} parent=51 // pred_fallthru
        _
    $region52: #{unet_block_attention_pallas.1} parent=5 // pred_fallthru
      _
    %p372 = scmp.le.s32.totalorder 1, %s18
    %p373 = scmp.lt.s32.totalorder %s18, 3
    %p374 = pnand %p372, %p373
    %p375 = pneg %p374
    // Predicated region
    $region61: #{unet_block_attention_pallas.1} parent=5 // pred_check
      _
    $region62: #{unet_block_attention_pallas.1} parent=5 // pred_check_branch
      %377 = sbr.rel (%p374) target = $region64
    $region63: #{unet_block_attention_pallas.1} parent=5 // pred_region
      %s378 = ssub.s32 %s18, 1
      %p379 = scmp.lt.s32.totalorder %s27, 1
      %s380 = scalar_select %p379, %s27, 1
      %p381 = scmp.lt.s32.totalorder %s28, 0
      %s382 = scalar_select %p381, %s28, 0
      %s383 = sadd.s32 %s382, %s380
      %s384 = smul.addr %s383, 8
      %s385 = scalar_lea.vmem %s0, %s384
      %p386 = pneg %p58
      %p387 = pneg %p55
      %s388 = smul.u32 2, %s28
      %p389 = scmp.lt.s32.totalorder %s27, 1
      %s390 = scalar_select %p389, %s27, 1
      %p391 = scmp.lt.s32.totalorder %s388, 1
      %s392 = scalar_select %p391, %s388, 1
      %s393 = smul.addr %s390, 2
      %s394 = sadd.s32 %s392, %s393
      %s395 = smul.addr %s394, 4
      %s396 = scalar_lea.vmem %s1, %s395
      %p397 = pneg %p86
      %p398 = pneg %p83
      %p399 = pneg %p107
      %p400 = pneg %p104
      %p401 = pneg %p128
      %p402 = pneg %p125
      %p403 = pneg %p149
      %p404 = pneg %p146
      %p405 = pneg %p170
      %p406 = pneg %p167
      %p407 = pneg %p191
      %p408 = pneg %p188
      %p409 = pneg %p212
      %p410 = pneg %p209
      %p411 = pneg %p233
      %p412 = pneg %p230
      %p413 = pneg %p254
      %p414 = pneg %p251
      %p415 = pneg %p275
      %p416 = pneg %p272
      %p417 = pneg %p303
      %p418 = pneg %p300
      %s419 = smul.u32 2, %s28
      %p420 = scmp.lt.s32.totalorder %s27, 1
      %s421 = scalar_select %p420, %s27, 1
      %p422 = scmp.lt.s32.totalorder %s419, 1
      %s423 = scalar_select %p422, %s419, 1
      %s424 = smul.addr %s421, 2
      %s425 = sadd.s32 %s423, %s424
      %s426 = smul.addr %s425, 4
      %s427 = scalar_lea.vmem %s11, %s426
      %p428 = scmp.lt.s32.totalorder %s27, 1
      %s429 = scalar_select %p428, %s27, 1
      %p430 = scmp.lt.s32.totalorder %s28, 0
      %s431 = scalar_select %p430, %s28, 0
      %s432 = sadd.s32 %s431, %s429
      %s433 = smul.addr %s432, 8
      %s434 = scalar_lea.vmem %s0, %s433
      %s435 = smul.u32 2, %s28
      %p436 = scmp.lt.s32.totalorder %s27, 1
      %s437 = scalar_select %p436, %s27, 1
      %p438 = scmp.lt.s32.totalorder %s435, 1
      %s439 = scalar_select %p438, %s435, 1
      %s440 = smul.addr %s437, 2
      %s441 = sadd.s32 %s439, %s440
      %s442 = smul.addr %s441, 4
      %s443 = scalar_lea.vmem %s1, %s442
      %s444 = smul.u32 2, %s28
      %s445 = smul.u32 2, %s28
      %p446 = scmp.lt.s32.totalorder %s27, 1
      %s447 = scalar_select %p446, %s27, 1
      %p448 = scmp.lt.s32.totalorder %s445, 1
      %s449 = scalar_select %p448, %s445, 1
      %s450 = smul.addr %s447, 2
      %s451 = sadd.s32 %s449, %s450
      %s452 = smul.addr %s451, 4
      %s453 = scalar_lea.vmem %s11, %s452
      %s454 = smul.u32 2, %s28
      %v456 = vld [vmem:[%s2] sm:$0xf]
      %v457 = vld [vmem:[%s2 + $0x4] sm:$0xf]
      %v458 = vld [vmem:[%s434] sm:$0xff]
      %v459 = vpack.c.bf16 %v458, %v458
      %v460 = vld [vmem:[%s3] sm:$0xff]
      %v461 = vld [vmem:[%s3 + $0x8] sm:$0xff]
      %463 = vset.pattern.permute.xlu0 0
      %464 = vperm.xlu0 %463, %v460
      %v465 = vpop.permute.xlu0 %464
      %468 = vset.pattern.permute.xlu0 0
      %469 = vperm.xlu0 %468, %v461
      %v470 = vpop.permute.xlu0 %469
      %v474 = vunpack.c.l.b16 %v456
      %v475 = vunpack.c.l.b16 %v457
      %v476 = vpack.c.b16 %v475, %v474
      %vm477 = vcmask 64512
      %v479 = vsel %vm477, %v476, 0
      %vm481 = vcmask 1043456
      %v483 = vsel %vm481, %v459, 0
      %485 = vmatpush.bf16.msra.mxu0 0
      %486 = vmatpush.bf16.msra.mxu0 0
      %487 = vmatpush.bf16.msra.mxu0 0
      %488 = vmatpush.bf16.msra.mxu0 0
      %489 = vmatpush.bf16.msra.mxu0 0
      %490 = vmatpush.bf16.msra.mxu0 0
      %491 = vmatpush.bf16.msra.mxu0 0
      %492 = vmatpush.bf16.msra.mxu0 %v483
      %493 = vmatmul.bf16.gmra.mxu0 %v479
      %v494 = vpop.f32.mrf.mxu0
      %v495 = vadd.f32 %v465, %v494
      %v496 = vpop.f32.mrf.mxu0
      %v497 = vadd.f32 %v470, %v496
      %498 = vdwg.mxu0
      %v499 = vmax.f32 %v495, 0.0
      %v500 = vmax.f32 %v497, 0.0
      %v501 = vld [vmem:[%s4] sm:$0xf]
      %v502 = vld [vmem:[%s5] sm:$0xf]
      %v503 = vpack.c.bf16 %v499, %v499
      %v505 = vrot.slane %v503, 2
      %v507 = vsel %vm477, %v505, 0
      %v510 = vsel %vm481, %v502, 0
      %512 = vmatpush.bf16.msra.mxu0 0
      %513 = vmatpush.bf16.msra.mxu0 0
      %514 = vmatpush.bf16.msra.mxu0 0
      %515 = vmatpush.bf16.msra.mxu0 0
      %516 = vmatpush.bf16.msra.mxu0 0
      %517 = vmatpush.bf16.msra.mxu0 0
      %518 = vmatpush.bf16.msra.mxu0 0
      %519 = vmatpush.bf16.msra.mxu0 %v510
      %520 = vmatmul.bf16.gmra.mxu0 %v507
      %v521 = vpop.f32.mrf.mxu0
      %v522 = vadd.f32 0.0, %v521
      %v523 = vpop.f32.mrf.mxu0
      %524 = vdwg.mxu0
      %v526 = vsel %vm477, %v503, 0
      %v529 = vsel %vm481, %v501, 0
      %531 = vmatpush.bf16.msra.mxu0 0
      %532 = vmatpush.bf16.msra.mxu0 0
      %533 = vmatpush.bf16.msra.mxu0 0
      %534 = vmatpush.bf16.msra.mxu0 0
      %535 = vmatpush.bf16.msra.mxu0 0
      %536 = vmatpush.bf16.msra.mxu0 0
      %537 = vmatpush.bf16.msra.mxu0 0
      %538 = vmatpush.bf16.msra.mxu0 %v529
      %539 = vmatmul.bf16.gmra.mxu0 %v526
      %v540 = vpop.f32.mrf.mxu0
      %v541 = vadd.f32 %v522, %v540
      %v542 = vpop.f32.mrf.mxu0
      %543 = vdwg.mxu0
      %vm544 = vcmask 125952
      %545 = vst.msk [vmem:[%s453] sm:$0xf] %vm544, %v541
      %v546 = vpack.c.bf16 %v500, %v500
      %v548 = vrot.slane %v546, 2
      %v550 = vsel %vm477, %v548, 0
      %552 = vmatpush.bf16.msra.mxu0 0
      %553 = vmatpush.bf16.msra.mxu0 0
      %554 = vmatpush.bf16.msra.mxu0 0
      %555 = vmatpush.bf16.msra.mxu0 0
      %556 = vmatpush.bf16.msra.mxu0 0
      %557 = vmatpush.bf16.msra.mxu0 0
      %558 = vmatpush.bf16.msra.mxu0 0
      %559 = vmatpush.bf16.msra.mxu0 %v510
      %560 = vmatmul.bf16.gmra.mxu0 %v550
      %v561 = vpop.f32.mrf.mxu0
      %v562 = vadd.f32 0.0, %v561
      %v563 = vpop.f32.mrf.mxu0
      %564 = vdwg.mxu0
      %v566 = vsel %vm477, %v546, 0
      %568 = vmatpush.bf16.msra.mxu0 0
      %569 = vmatpush.bf16.msra.mxu0 0
      %570 = vmatpush.bf16.msra.mxu0 0
      %571 = vmatpush.bf16.msra.mxu0 0
      %572 = vmatpush.bf16.msra.mxu0 0
      %573 = vmatpush.bf16.msra.mxu0 0
      %574 = vmatpush.bf16.msra.mxu0 0
      %575 = vmatpush.bf16.msra.mxu0 %v529
      %576 = vmatmul.bf16.gmra.mxu0 %v566
      %v577 = vpop.f32.mrf.mxu0
      %v578 = vadd.f32 %v562, %v577
      %v579 = vpop.f32.mrf.mxu0
      %580 = vdwg.mxu0
      %582 = vrot.lane.b32.xlu0 %v578, 16
      %v583 = vpop.permute.xlu0 %582
      %vm585 = vcmask 257152
      %586 = vst.msk [vmem:[%s453] sm:$0xf] %vm585, %v583
      %587 = vrot.lane.b32.xlu0 %v505, 120
      %v588 = vpop.permute.xlu0 %587
      %v590 = vsel %vm477, %v588, 0
      %592 = vmatpush.bf16.msra.mxu0 0
      %593 = vmatpush.bf16.msra.mxu0 0
      %594 = vmatpush.bf16.msra.mxu0 0
      %595 = vmatpush.bf16.msra.mxu0 0
      %596 = vmatpush.bf16.msra.mxu0 0
      %597 = vmatpush.bf16.msra.mxu0 0
      %598 = vmatpush.bf16.msra.mxu0 0
      %599 = vmatpush.bf16.msra.mxu0 %v510
      %600 = vmatmul.bf16.gmra.mxu0 %v590
      %v601 = vpop.f32.mrf.mxu0
      %v602 = vadd.f32 0.0, %v601
      %v603 = vpop.f32.mrf.mxu0
      %604 = vdwg.mxu0
      %605 = vrot.lane.b32.xlu0 %v503, 120
      %v606 = vpop.permute.xlu0 %605
      %v608 = vsel %vm477, %v606, 0
      %610 = vmatpush.bf16.msra.mxu0 0
      %611 = vmatpush.bf16.msra.mxu0 0
      %612 = vmatpush.bf16.msra.mxu0 0
      %613 = vmatpush.bf16.msra.mxu0 0
      %614 = vmatpush.bf16.msra.mxu0 0
      %615 = vmatpush.bf16.msra.mxu0 0
      %616 = vmatpush.bf16.msra.mxu0 0
      %617 = vmatpush.bf16.msra.mxu0 %v529
      %618 = vmatmul.bf16.gmra.mxu0 %v608
      %v619 = vpop.f32.mrf.mxu0
      %v620 = vadd.f32 %v602, %v619
      %v621 = vpop.f32.mrf.mxu0
      %622 = vdwg.mxu0
      %624 = vrot.lane.b32.xlu0 %v620, 32
      %v625 = vpop.permute.xlu0 %624
      %vm627 = vcmask 388352
      %628 = vst.msk [vmem:[%s453] sm:$0xf] %vm627, %v625
      %629 = vrot.lane.b32.xlu0 %v548, 120
      %v630 = vpop.permute.xlu0 %629
      %v632 = vsel %vm477, %v630, 0
      %634 = vmatpush.bf16.msra.mxu0 0
      %635 = vmatpush.bf16.msra.mxu0 0
      %636 = vmatpush.bf16.msra.mxu0 0
      %637 = vmatpush.bf16.msra.mxu0 0
      %638 = vmatpush.bf16.msra.mxu0 0
      %639 = vmatpush.bf16.msra.mxu0 0
      %640 = vmatpush.bf16.msra.mxu0 0
      %641 = vmatpush.bf16.msra.mxu0 %v510
      %642 = vmatmul.bf16.gmra.mxu0 %v632
      %v643 = vpop.f32.mrf.mxu0
      %v644 = vadd.f32 0.0, %v643
      %v645 = vpop.f32.mrf.mxu0
      %646 = vdwg.mxu0
      %647 = vrot.lane.b32.xlu0 %v546, 120
      %v648 = vpop.permute.xlu0 %647
      %v650 = vsel %vm477, %v648, 0
      %652 = vmatpush.bf16.msra.mxu0 0
      %653 = vmatpush.bf16.msra.mxu0 0
      %654 = vmatpush.bf16.msra.mxu0 0
      %655 = vmatpush.bf16.msra.mxu0 0
      %656 = vmatpush.bf16.msra.mxu0 0
      %657 = vmatpush.bf16.msra.mxu0 0
      %658 = vmatpush.bf16.msra.mxu0 0
      %659 = vmatpush.bf16.msra.mxu0 %v529
      %660 = vmatmul.bf16.gmra.mxu0 %v650
      %v661 = vpop.f32.mrf.mxu0
      %v662 = vadd.f32 %v644, %v661
      %v663 = vpop.f32.mrf.mxu0
      %664 = vdwg.mxu0
      %666 = vrot.lane.b32.xlu0 %v662, 48
      %v667 = vpop.permute.xlu0 %666
      %vm669 = vcmask 519552
      %670 = vst.msk [vmem:[%s453] sm:$0xf] %vm669, %v667
      %671 = vrot.lane.b32.xlu0 %v505, 112
      %v672 = vpop.permute.xlu0 %671
      %v674 = vsel %vm477, %v672, 0
      %676 = vmatpush.bf16.msra.mxu0 0
      %677 = vmatpush.bf16.msra.mxu0 0
      %678 = vmatpush.bf16.msra.mxu0 0
      %679 = vmatpush.bf16.msra.mxu0 0
      %680 = vmatpush.bf16.msra.mxu0 0
      %681 = vmatpush.bf16.msra.mxu0 0
      %682 = vmatpush.bf16.msra.mxu0 0
      %683 = vmatpush.bf16.msra.mxu0 %v510
      %684 = vmatmul.bf16.gmra.mxu0 %v674
      %v685 = vpop.f32.mrf.mxu0
      %v686 = vadd.f32 0.0, %v685
      %v687 = vpop.f32.mrf.mxu0
      %688 = vdwg.mxu0
      %689 = vrot.lane.b32.xlu0 %v503, 112
      %v690 = vpop.permute.xlu0 %689
      %v692 = vsel %vm477, %v690, 0
      %694 = vmatpush.bf16.msra.mxu0 0
      %695 = vmatpush.bf16.msra.mxu0 0
      %696 = vmatpush.bf16.msra.mxu0 0
      %697 = vmatpush.bf16.msra.mxu0 0
      %698 = vmatpush.bf16.msra.mxu0 0
      %699 = vmatpush.bf16.msra.mxu0 0
      %700 = vmatpush.bf16.msra.mxu0 0
      %701 = vmatpush.bf16.msra.mxu0 %v529
      %702 = vmatmul.bf16.gmra.mxu0 %v692
      %v703 = vpop.f32.mrf.mxu0
      %v704 = vadd.f32 %v686, %v703
      %v705 = vpop.f32.mrf.mxu0
      %706 = vdwg.mxu0
      %708 = vrot.lane.b32.xlu0 %v704, 64
      %v709 = vpop.permute.xlu0 %708
      %vm711 = vcmask 650752
      %712 = vst.msk [vmem:[%s453] sm:$0xf] %vm711, %v709
      %713 = vrot.lane.b32.xlu0 %v548, 112
      %v714 = vpop.permute.xlu0 %713
      %v716 = vsel %vm477, %v714, 0
      %718 = vmatpush.bf16.msra.mxu0 0
      %719 = vmatpush.bf16.msra.mxu0 0
      %720 = vmatpush.bf16.msra.mxu0 0
      %721 = vmatpush.bf16.msra.mxu0 0
      %722 = vmatpush.bf16.msra.mxu0 0
      %723 = vmatpush.bf16.msra.mxu0 0
      %724 = vmatpush.bf16.msra.mxu0 0
      %725 = vmatpush.bf16.msra.mxu0 %v510
      %726 = vmatmul.bf16.gmra.mxu0 %v716
      %v727 = vpop.f32.mrf.mxu0
      %v728 = vadd.f32 0.0, %v727
      %v729 = vpop.f32.mrf.mxu0
      %730 = vdwg.mxu0
      %731 = vrot.lane.b32.xlu0 %v546, 112
      %v732 = vpop.permute.xlu0 %731
      %v734 = vsel %vm477, %v732, 0
      %736 = vmatpush.bf16.msra.mxu0 0
      %737 = vmatpush.bf16.msra.mxu0 0
      %738 = vmatpush.bf16.msra.mxu0 0
      %739 = vmatpush.bf16.msra.mxu0 0
      %740 = vmatpush.bf16.msra.mxu0 0
      %741 = vmatpush.bf16.msra.mxu0 0
      %742 = vmatpush.bf16.msra.mxu0 0
      %743 = vmatpush.bf16.msra.mxu0 %v529
      %744 = vmatmul.bf16.gmra.mxu0 %v734
      %v745 = vpop.f32.mrf.mxu0
      %v746 = vadd.f32 %v728, %v745
      %v747 = vpop.f32.mrf.mxu0
      %748 = vdwg.mxu0
      %750 = vrot.lane.b32.xlu0 %v746, 80
      %v751 = vpop.permute.xlu0 %750
      %vm753 = vcmask 781952
      %754 = vst.msk [vmem:[%s453] sm:$0xf] %vm753, %v751
      %755 = vrot.lane.b32.xlu0 %v505, 104
      %v756 = vpop.permute.xlu0 %755
      %v758 = vsel %vm477, %v756, 0
      %760 = vmatpush.bf16.msra.mxu0 0
      %761 = vmatpush.bf16.msra.mxu0 0
      %762 = vmatpush.bf16.msra.mxu0 0
      %763 = vmatpush.bf16.msra.mxu0 0
      %764 = vmatpush.bf16.msra.mxu0 0
      %765 = vmatpush.bf16.msra.mxu0 0
      %766 = vmatpush.bf16.msra.mxu0 0
      %767 = vmatpush.bf16.msra.mxu0 %v510
      %768 = vmatmul.bf16.gmra.mxu0 %v758
      %v769 = vpop.f32.mrf.mxu0
      %v770 = vadd.f32 0.0, %v769
      %v771 = vpop.f32.mrf.mxu0
      %772 = vdwg.mxu0
      %773 = vrot.lane.b32.xlu0 %v503, 104
      %v774 = vpop.permute.xlu0 %773
      %v776 = vsel %vm477, %v774, 0
      %778 = vmatpush.bf16.msra.mxu0 0
      %779 = vmatpush.bf16.msra.mxu0 0
      %780 = vmatpush.bf16.msra.mxu0 0
      %781 = vmatpush.bf16.msra.mxu0 0
      %782 = vmatpush.bf16.msra.mxu0 0
      %783 = vmatpush.bf16.msra.mxu0 0
      %784 = vmatpush.bf16.msra.mxu0 0
      %785 = vmatpush.bf16.msra.mxu0 %v529
      %786 = vmatmul.bf16.gmra.mxu0 %v776
      %v787 = vpop.f32.mrf.mxu0
      %v788 = vadd.f32 %v770, %v787
      %v789 = vpop.f32.mrf.mxu0
      %790 = vdwg.mxu0
      %792 = vrot.lane.b32.xlu0 %v788, 96
      %v793 = vpop.permute.xlu0 %792
      %vm795 = vcmask 913152
      %796 = vst.msk [vmem:[%s453] sm:$0xf] %vm795, %v793
      %797 = vrot.lane.b32.xlu0 %v548, 104
      %v798 = vpop.permute.xlu0 %797
      %v800 = vsel %vm477, %v798, 0
      %802 = vmatpush.bf16.msra.mxu0 0
      %803 = vmatpush.bf16.msra.mxu0 0
      %804 = vmatpush.bf16.msra.mxu0 0
      %805 = vmatpush.bf16.msra.mxu0 0
      %806 = vmatpush.bf16.msra.mxu0 0
      %807 = vmatpush.bf16.msra.mxu0 0
      %808 = vmatpush.bf16.msra.mxu0 0
      %809 = vmatpush.bf16.msra.mxu0 %v510
      %810 = vmatmul.bf16.gmra.mxu0 %v800
      %v811 = vpop.f32.mrf.mxu0
      %v812 = vadd.f32 0.0, %v811
      %v813 = vpop.f32.mrf.mxu0
      %814 = vdwg.mxu0
      %815 = vrot.lane.b32.xlu0 %v546, 104
      %v816 = vpop.permute.xlu0 %815
      %v818 = vsel %vm477, %v816, 0
      %820 = vmatpush.bf16.msra.mxu0 0
      %821 = vmatpush.bf16.msra.mxu0 0
      %822 = vmatpush.bf16.msra.mxu0 0
      %823 = vmatpush.bf16.msra.mxu0 0
      %824 = vmatpush.bf16.msra.mxu0 0
      %825 = vmatpush.bf16.msra.mxu0 0
      %826 = vmatpush.bf16.msra.mxu0 0
      %827 = vmatpush.bf16.msra.mxu0 %v529
      %828 = vmatmul.bf16.gmra.mxu0 %v818
      %v829 = vpop.f32.mrf.mxu0
      %v830 = vadd.f32 %v812, %v829
      %v831 = vpop.f32.mrf.mxu0
      %832 = vdwg.mxu0
      %834 = vrot.lane.b32.xlu0 %v830, 112
      %v835 = vpop.permute.xlu0 %834
      %vm837 = vcmask 1044352
      %838 = vst.msk [vmem:[%s453] sm:$0xf] %vm837, %v835
      %839 = vrot.lane.b32.xlu0 %v505, 96
      %v840 = vpop.permute.xlu0 %839
      %v842 = vsel %vm477, %v840, 0
      %844 = vmatpush.bf16.msra.mxu0 0
      %845 = vmatpush.bf16.msra.mxu0 0
      %846 = vmatpush.bf16.msra.mxu0 0
      %847 = vmatpush.bf16.msra.mxu0 0
      %848 = vmatpush.bf16.msra.mxu0 0
      %849 = vmatpush.bf16.msra.mxu0 0
      %850 = vmatpush.bf16.msra.mxu0 0
      %851 = vmatpush.bf16.msra.mxu0 %v510
      %852 = vmatmul.bf16.gmra.mxu0 %v842
      %v853 = vpop.f32.mrf.mxu0
      %v854 = vadd.f32 0.0, %v853
      %v855 = vpop.f32.mrf.mxu0
      %856 = vdwg.mxu0
      %857 = vrot.lane.b32.xlu0 %v503, 96
      %v858 = vpop.permute.xlu0 %857
      %v860 = vsel %vm477, %v858, 0
      %862 = vmatpush.bf16.msra.mxu0 0
      %863 = vmatpush.bf16.msra.mxu0 0
      %864 = vmatpush.bf16.msra.mxu0 0
      %865 = vmatpush.bf16.msra.mxu0 0
      %866 = vmatpush.bf16.msra.mxu0 0
      %867 = vmatpush.bf16.msra.mxu0 0
      %868 = vmatpush.bf16.msra.mxu0 0
      %869 = vmatpush.bf16.msra.mxu0 %v529
      %870 = vmatmul.bf16.gmra.mxu0 %v860
      %v871 = vpop.f32.mrf.mxu0
      %v872 = vadd.f32 %v854, %v871
      %v873 = vpop.f32.mrf.mxu0
      %874 = vdwg.mxu0
      %875 = vst.msk [vmem:[%s453 + $0x4] sm:$0xf] %vm544, %v872
      %876 = vrot.lane.b32.xlu0 %v548, 96
      %v877 = vpop.permute.xlu0 %876
      %v879 = vsel %vm477, %v877, 0
      %881 = vmatpush.bf16.msra.mxu0 0
      %882 = vmatpush.bf16.msra.mxu0 0
      %883 = vmatpush.bf16.msra.mxu0 0
      %884 = vmatpush.bf16.msra.mxu0 0
      %885 = vmatpush.bf16.msra.mxu0 0
      %886 = vmatpush.bf16.msra.mxu0 0
      %887 = vmatpush.bf16.msra.mxu0 0
      %888 = vmatpush.bf16.msra.mxu0 %v510
      %889 = vmatmul.bf16.gmra.mxu0 %v879
      %v890 = vpop.f32.mrf.mxu0
      %v891 = vadd.f32 0.0, %v890
      %v892 = vpop.f32.mrf.mxu0
      %893 = vdwg.mxu0
      %894 = vrot.lane.b32.xlu0 %v546, 96
      %v895 = vpop.permute.xlu0 %894
      %v897 = vsel %vm477, %v895, 0
      %899 = vmatpush.bf16.msra.mxu0 0
      %900 = vmatpush.bf16.msra.mxu0 0
      %901 = vmatpush.bf16.msra.mxu0 0
      %902 = vmatpush.bf16.msra.mxu0 0
      %903 = vmatpush.bf16.msra.mxu0 0
      %904 = vmatpush.bf16.msra.mxu0 0
      %905 = vmatpush.bf16.msra.mxu0 0
      %906 = vmatpush.bf16.msra.mxu0 %v529
      %907 = vmatmul.bf16.gmra.mxu0 %v897
      %v908 = vpop.f32.mrf.mxu0
      %v909 = vadd.f32 %v891, %v908
      %v910 = vpop.f32.mrf.mxu0
      %911 = vdwg.mxu0
      %913 = vrot.lane.b32.xlu0 %v909, 16
      %v914 = vpop.permute.xlu0 %913
      %916 = vst.msk [vmem:[%s453 + $0x4] sm:$0xf] %vm585, %v914
      %917 = vrot.lane.b32.xlu0 %v505, 88
      %v918 = vpop.permute.xlu0 %917
      %v920 = vsel %vm477, %v918, 0
      %922 = vmatpush.bf16.msra.mxu0 0
      %923 = vmatpush.bf16.msra.mxu0 0
      %924 = vmatpush.bf16.msra.mxu0 0
      %925 = vmatpush.bf16.msra.mxu0 0
      %926 = vmatpush.bf16.msra.mxu0 0
      %927 = vmatpush.bf16.msra.mxu0 0
      %928 = vmatpush.bf16.msra.mxu0 0
      %929 = vmatpush.bf16.msra.mxu0 %v510
      %930 = vmatmul.bf16.gmra.mxu0 %v920
      %v931 = vpop.f32.mrf.mxu0
      %v932 = vadd.f32 0.0, %v931
      %v933 = vpop.f32.mrf.mxu0
      %934 = vdwg.mxu0
      %935 = vrot.lane.b32.xlu0 %v503, 88
      %v936 = vpop.permute.xlu0 %935
      %v938 = vsel %vm477, %v936, 0
      %940 = vmatpush.bf16.msra.mxu0 0
      %941 = vmatpush.bf16.msra.mxu0 0
      %942 = vmatpush.bf16.msra.mxu0 0
      %943 = vmatpush.bf16.msra.mxu0 0
      %944 = vmatpush.bf16.msra.mxu0 0
      %945 = vmatpush.bf16.msra.mxu0 0
      %946 = vmatpush.bf16.msra.mxu0 0
      %947 = vmatpush.bf16.msra.mxu0 %v529
      %948 = vmatmul.bf16.gmra.mxu0 %v938
      %v949 = vpop.f32.mrf.mxu0
      %v950 = vadd.f32 %v932, %v949
      %v951 = vpop.f32.mrf.mxu0
      %952 = vdwg.mxu0
      %954 = vrot.lane.b32.xlu0 %v950, 32
      %v955 = vpop.permute.xlu0 %954
      %957 = vst.msk [vmem:[%s453 + $0x4] sm:$0xf] %vm627, %v955
      %958 = vrot.lane.b32.xlu0 %v548, 88
      %v959 = vpop.permute.xlu0 %958
      %v961 = vsel %vm477, %v959, 0
      %963 = vmatpush.bf16.msra.mxu0 0
      %964 = vmatpush.bf16.msra.mxu0 0
      %965 = vmatpush.bf16.msra.mxu0 0
      %966 = vmatpush.bf16.msra.mxu0 0
      %967 = vmatpush.bf16.msra.mxu0 0
      %968 = vmatpush.bf16.msra.mxu0 0
      %969 = vmatpush.bf16.msra.mxu0 0
      %970 = vmatpush.bf16.msra.mxu0 %v510
      %971 = vmatmul.bf16.gmra.mxu0 %v961
      %v972 = vpop.f32.mrf.mxu0
      %v973 = vadd.f32 0.0, %v972
      %v974 = vpop.f32.mrf.mxu0
      %975 = vdwg.mxu0
      %976 = vrot.lane.b32.xlu0 %v546, 88
      %v977 = vpop.permute.xlu0 %976
      %v979 = vsel %vm477, %v977, 0
      %981 = vmatpush.bf16.msra.mxu0 0
      %982 = vmatpush.bf16.msra.mxu0 0
      %983 = vmatpush.bf16.msra.mxu0 0
      %984 = vmatpush.bf16.msra.mxu0 0
      %985 = vmatpush.bf16.msra.mxu0 0
      %986 = vmatpush.bf16.msra.mxu0 0
      %987 = vmatpush.bf16.msra.mxu0 0
      %988 = vmatpush.bf16.msra.mxu0 %v529
      %989 = vmatmul.bf16.gmra.mxu0 %v979
      %v990 = vpop.f32.mrf.mxu0
      %v991 = vadd.f32 %v973, %v990
      %v992 = vpop.f32.mrf.mxu0
      %993 = vdwg.mxu0
      %995 = vrot.lane.b32.xlu0 %v991, 48
      %v996 = vpop.permute.xlu0 %995
      %998 = vst.msk [vmem:[%s453 + $0x4] sm:$0xf] %vm669, %v996
      %999 = vrot.lane.b32.xlu0 %v505, 80
      %v1000 = vpop.permute.xlu0 %999
      %v1002 = vsel %vm477, %v1000, 0
      %1004 = vmatpush.bf16.msra.mxu0 0
      %1005 = vmatpush.bf16.msra.mxu0 0
      %1006 = vmatpush.bf16.msra.mxu0 0
      %1007 = vmatpush.bf16.msra.mxu0 0
      %1008 = vmatpush.bf16.msra.mxu0 0
      %1009 = vmatpush.bf16.msra.mxu0 0
      %1010 = vmatpush.bf16.msra.mxu0 0
      %1011 = vmatpush.bf16.msra.mxu0 %v510
      %1012 = vmatmul.bf16.gmra.mxu0 %v1002
      %v1013 = vpop.f32.mrf.mxu0
      %v1014 = vadd.f32 0.0, %v1013
      %v1015 = vpop.f32.mrf.mxu0
      %1016 = vdwg.mxu0
      %1017 = vrot.lane.b32.xlu0 %v503, 80
      %v1018 = vpop.permute.xlu0 %1017
      %v1020 = vsel %vm477, %v1018, 0
      %1022 = vmatpush.bf16.msra.mxu0 0
      %1023 = vmatpush.bf16.msra.mxu0 0
      %1024 = vmatpush.bf16.msra.mxu0 0
      %1025 = vmatpush.bf16.msra.mxu0 0
      %1026 = vmatpush.bf16.msra.mxu0 0
      %1027 = vmatpush.bf16.msra.mxu0 0
      %1028 = vmatpush.bf16.msra.mxu0 0
      %1029 = vmatpush.bf16.msra.mxu0 %v529
      %1030 = vmatmul.bf16.gmra.mxu0 %v1020
      %v1031 = vpop.f32.mrf.mxu0
      %v1032 = vadd.f32 %v1014, %v1031
      %v1033 = vpop.f32.mrf.mxu0
      %1034 = vdwg.mxu0
      %1036 = vrot.lane.b32.xlu0 %v1032, 64
      %v1037 = vpop.permute.xlu0 %1036
      %1039 = vst.msk [vmem:[%s453 + $0x4] sm:$0xf] %vm711, %v1037
      %1040 = vrot.lane.b32.xlu0 %v548, 80
      %v1041 = vpop.permute.xlu0 %1040
      %v1043 = vsel %vm477, %v1041, 0
      %1045 = vmatpush.bf16.msra.mxu0 0
      %1046 = vmatpush.bf16.msra.mxu0 0
      %1047 = vmatpush.bf16.msra.mxu0 0
      %1048 = vmatpush.bf16.msra.mxu0 0
      %1049 = vmatpush.bf16.msra.mxu0 0
      %1050 = vmatpush.bf16.msra.mxu0 0
      %1051 = vmatpush.bf16.msra.mxu0 0
      %1052 = vmatpush.bf16.msra.mxu0 %v510
      %1053 = vmatmul.bf16.gmra.mxu0 %v1043
      %v1054 = vpop.f32.mrf.mxu0
      %v1055 = vadd.f32 0.0, %v1054
      %v1056 = vpop.f32.mrf.mxu0
      %1057 = vdwg.mxu0
      %1058 = vrot.lane.b32.xlu0 %v546, 80
      %v1059 = vpop.permute.xlu0 %1058
      %v1061 = vsel %vm477, %v1059, 0
      %1063 = vmatpush.bf16.msra.mxu0 0
      %1064 = vmatpush.bf16.msra.mxu0 0
      %1065 = vmatpush.bf16.msra.mxu0 0
      %1066 = vmatpush.bf16.msra.mxu0 0
      %1067 = vmatpush.bf16.msra.mxu0 0
      %1068 = vmatpush.bf16.msra.mxu0 0
      %1069 = vmatpush.bf16.msra.mxu0 0
      %1070 = vmatpush.bf16.msra.mxu0 %v529
      %1071 = vmatmul.bf16.gmra.mxu0 %v1061
      %v1072 = vpop.f32.mrf.mxu0
      %v1073 = vadd.f32 %v1055, %v1072
      %v1074 = vpop.f32.mrf.mxu0
      %1075 = vdwg.mxu0
      %1077 = vrot.lane.b32.xlu0 %v1073, 80
      %v1078 = vpop.permute.xlu0 %1077
      %1080 = vst.msk [vmem:[%s453 + $0x4] sm:$0xf] %vm753, %v1078
      %1081 = vrot.lane.b32.xlu0 %v505, 72
      %v1082 = vpop.permute.xlu0 %1081
      %v1084 = vsel %vm477, %v1082, 0
      %1086 = vmatpush.bf16.msra.mxu0 0
      %1087 = vmatpush.bf16.msra.mxu0 0
      %1088 = vmatpush.bf16.msra.mxu0 0
      %1089 = vmatpush.bf16.msra.mxu0 0
      %1090 = vmatpush.bf16.msra.mxu0 0
      %1091 = vmatpush.bf16.msra.mxu0 0
      %1092 = vmatpush.bf16.msra.mxu0 0
      %1093 = vmatpush.bf16.msra.mxu0 %v510
      %1094 = vmatmul.bf16.gmra.mxu0 %v1084
      %v1095 = vpop.f32.mrf.mxu0
      %v1096 = vadd.f32 0.0, %v1095
      %v1097 = vpop.f32.mrf.mxu0
      %1098 = vdwg.mxu0
      %1099 = vrot.lane.b32.xlu0 %v503, 72
      %v1100 = vpop.permute.xlu0 %1099
      %v1102 = vsel %vm477, %v1100, 0
      %1104 = vmatpush.bf16.msra.mxu0 0
      %1105 = vmatpush.bf16.msra.mxu0 0
      %1106 = vmatpush.bf16.msra.mxu0 0
      %1107 = vmatpush.bf16.msra.mxu0 0
      %1108 = vmatpush.bf16.msra.mxu0 0
      %1109 = vmatpush.bf16.msra.mxu0 0
      %1110 = vmatpush.bf16.msra.mxu0 0
      %1111 = vmatpush.bf16.msra.mxu0 %v529
      %1112 = vmatmul.bf16.gmra.mxu0 %v1102
      %v1113 = vpop.f32.mrf.mxu0
      %v1114 = vadd.f32 %v1096, %v1113
      %v1115 = vpop.f32.mrf.mxu0
      %1116 = vdwg.mxu0
      %1118 = vrot.lane.b32.xlu0 %v1114, 96
      %v1119 = vpop.permute.xlu0 %1118
      %1121 = vst.msk [vmem:[%s453 + $0x4] sm:$0xf] %vm795, %v1119
      %1122 = vrot.lane.b32.xlu0 %v548, 72
      %v1123 = vpop.permute.xlu0 %1122
      %v1125 = vsel %vm477, %v1123, 0
      %1127 = vmatpush.bf16.msra.mxu0 0
      %1128 = vmatpush.bf16.msra.mxu0 0
      %1129 = vmatpush.bf16.msra.mxu0 0
      %1130 = vmatpush.bf16.msra.mxu0 0
      %1131 = vmatpush.bf16.msra.mxu0 0
      %1132 = vmatpush.bf16.msra.mxu0 0
      %1133 = vmatpush.bf16.msra.mxu0 0
      %1134 = vmatpush.bf16.msra.mxu0 %v510
      %1135 = vmatmul.bf16.gmra.mxu0 %v1125
      %v1136 = vpop.f32.mrf.mxu0
      %v1137 = vadd.f32 0.0, %v1136
      %v1138 = vpop.f32.mrf.mxu0
      %1139 = vdwg.mxu0
      %1140 = vrot.lane.b32.xlu0 %v546, 72
      %v1141 = vpop.permute.xlu0 %1140
      %v1143 = vsel %vm477, %v1141, 0
      %1145 = vmatpush.bf16.msra.mxu0 0
      %1146 = vmatpush.bf16.msra.mxu0 0
      %1147 = vmatpush.bf16.msra.mxu0 0
      %1148 = vmatpush.bf16.msra.mxu0 0
      %1149 = vmatpush.bf16.msra.mxu0 0
      %1150 = vmatpush.bf16.msra.mxu0 0
      %1151 = vmatpush.bf16.msra.mxu0 0
      %1152 = vmatpush.bf16.msra.mxu0 %v529
      %1153 = vmatmul.bf16.gmra.mxu0 %v1143
      %v1154 = vpop.f32.mrf.mxu0
      %v1155 = vadd.f32 %v1137, %v1154
      %v1156 = vpop.f32.mrf.mxu0
      %1157 = vdwg.mxu0
      %1159 = vrot.lane.b32.xlu0 %v1155, 112
      %v1160 = vpop.permute.xlu0 %1159
      %1162 = vst.msk [vmem:[%s453 + $0x4] sm:$0xf] %vm837, %v1160
      %v1163 = vld [vmem:[%s453] sm:$0xff]
      %v1164 = vld [vmem:[%s6] sm:$0x3]
      %v1165 = vld [vmem:[%s443] sm:$0xff]
      %1167 = vst [vmem:[#allocation1] ss:$2 sm:$0xff] %v1165
      %v1168 = vld.sshfl [vmem:[#allocation1] sm:$0xff pattern:$0x75316420]
      %v1169 = vld.sshfl [vmem:[#allocation1 + $0x8] sm:$0xff pattern:$0x75316420]
      %v1172 = vpack.c.bf16 %v1168, %v1168
      %v1173 = vpack.c.bf16 %v1169, %v1169
      %v1174 = vld [vmem:[%s7] sm:$0x3]
      %1176 = vst [vmem:[#allocation1] ss:$2 sm:$0xff] %v1163
      %v1177 = vld.sshfl [vmem:[#allocation1] sm:$0xff pattern:$0x75316420]
      %v1178 = vld.sshfl [vmem:[#allocation1 + $0x8] sm:$0xff pattern:$0x75316420]
      %v1181 = vpack.c.bf16 %v1177, %v1177
      %v1182 = vpack.c.bf16 %v1178, %v1178
      %vm1183 = vcmask 31744
      %v1185 = vsel %vm1183, %v1174, 0
      %vm1187 = vcmask 1041408
      %v1189 = vsel %vm1187, %v1181, 0
      %v1192 = vsel %vm1187, %v1182, 0
      %1194 = vmatpush.bf16.msra.mxu0 0
      %1195 = vmatpush.bf16.msra.mxu0 0
      %1196 = vmatpush.bf16.msra.mxu0 0
      %1197 = vmatpush.bf16.msra.mxu0 0
      %1198 = vmatpush.bf16.msra.mxu0 0
      %1199 = vmatpush.bf16.msra.mxu0 0
      %1200 = vmatpush.bf16.msra.mxu0 0
      %1201 = vmatpush.bf16.msra.mxu0 %v1189
      %1202 = vmatmul.bf16.gmra.mxu0 %v1185
      %v1203 = vpop.f32.mrf.mxu0
      %v1204 = vadd.f32 0.0, %v1203
      %v1205 = vpop.f32.mrf.mxu0
      %1206 = vdwg.mxu0
      %1207 = vmatpush.bf16.msra.mxu0 0
      %1208 = vmatpush.bf16.msra.mxu0 0
      %1209 = vmatpush.bf16.msra.mxu0 0
      %1210 = vmatpush.bf16.msra.mxu0 0
      %1211 = vmatpush.bf16.msra.mxu0 0
      %1212 = vmatpush.bf16.msra.mxu0 0
      %1213 = vmatpush.bf16.msra.mxu0 0
      %1214 = vmatpush.bf16.msra.mxu0 %v1192
      %1215 = vmatmul.bf16.gmra.mxu0 %v1185
      %v1216 = vpop.f32.mrf.mxu0
      %v1217 = vadd.f32 0.0, %v1216
      %v1218 = vpop.f32.mrf.mxu0
      %1219 = vdwg.mxu0
      %v1221 = vsel %vm1183, %v1164, 0
      %v1224 = vsel %vm1187, %v1172, 0
      %v1227 = vsel %vm1187, %v1173, 0
      %1229 = vmatpush.bf16.msra.mxu0 0
      %1230 = vmatpush.bf16.msra.mxu0 0
      %1231 = vmatpush.bf16.msra.mxu0 0
      %1232 = vmatpush.bf16.msra.mxu0 0
      %1233 = vmatpush.bf16.msra.mxu0 0
      %1234 = vmatpush.bf16.msra.mxu0 0
      %1235 = vmatpush.bf16.msra.mxu0 0
      %1236 = vmatpush.bf16.msra.mxu0 %v1224
      %1237 = vmatmul.bf16.gmra.mxu0 %v1221
      %v1238 = vpop.f32.mrf.mxu0
      %v1239 = vadd.f32 %v1204, %v1238
      %v1240 = vpop.f32.mrf.mxu0
      %1241 = vdwg.mxu0
      %1242 = vmatpush.bf16.msra.mxu0 0
      %1243 = vmatpush.bf16.msra.mxu0 0
      %1244 = vmatpush.bf16.msra.mxu0 0
      %1245 = vmatpush.bf16.msra.mxu0 0
      %1246 = vmatpush.bf16.msra.mxu0 0
      %1247 = vmatpush.bf16.msra.mxu0 0
      %1248 = vmatpush.bf16.msra.mxu0 0
      %1249 = vmatpush.bf16.msra.mxu0 %v1227
      %1250 = vmatmul.bf16.gmra.mxu0 %v1221
      %v1251 = vpop.f32.mrf.mxu0
      %v1252 = vadd.f32 %v1217, %v1251
      %v1253 = vpop.f32.mrf.mxu0
      %1254 = vdwg.mxu0
      %v1255 = vld [vmem:[%s8] sm:$0xf]
      %1257 = vset.pattern.permute.xlu0 0
      %1258 = vperm.xlu0 %1257, %v1255
      %v1259 = vpop.permute.xlu0 %1258
      %v1261 = vadd.f32 %v1239, %v1259
      %v1262 = vadd.f32 %v1252, %v1259
      %v1263 = vmax.f32 %v1261, 0.0
      %v1264 = vmax.f32 %v1262, 0.0
      %v1265 = vld [vmem:[%s9] sm:$0x1]
      %v1266 = vpack.c.bf16 %v1263, %v1263
      %v1267 = vpack.c.bf16 %v1264, %v1264
      %s1268 = sld [smem:[#allocation2]]
      %v1269 = vstv %s1268
      %v1271 = vsel %vm1183, %v1265, 0
      %v1274 = vsel %vm1187, %v1266, 0
      %v1277 = vsel %vm1187, %v1267, 0
      %1279 = vmatpush.bf16.msra.mxu0 0
      %1280 = vmatpush.bf16.msra.mxu0 0
      %1281 = vmatpush.bf16.msra.mxu0 0
      %1282 = vmatpush.bf16.msra.mxu0 0
      %1283 = vmatpush.bf16.msra.mxu0 0
      %1284 = vmatpush.bf16.msra.mxu0 0
      %1285 = vmatpush.bf16.msra.mxu0 0
      %1286 = vmatpush.bf16.msra.mxu0 %v1274
      %1287 = vmatmul.bf16.gmra.mxu0 %v1271
      %v1288 = vpop.f32.mrf.mxu0
      %v1289 = vadd.f32 %v1269, %v1288
      %v1290 = vpop.f32.mrf.mxu0
      %1291 = vdwg.mxu0
      %1292 = vmatpush.bf16.msra.mxu0 0
      %1293 = vmatpush.bf16.msra.mxu0 0
      %1294 = vmatpush.bf16.msra.mxu0 0
      %1295 = vmatpush.bf16.msra.mxu0 0
      %1296 = vmatpush.bf16.msra.mxu0 0
      %1297 = vmatpush.bf16.msra.mxu0 0
      %1298 = vmatpush.bf16.msra.mxu0 0
      %1299 = vmatpush.bf16.msra.mxu0 %v1277
      %1300 = vmatmul.bf16.gmra.mxu0 %v1271
      %v1301 = vpop.f32.mrf.mxu0
      %v1302 = vadd.f32 %v1269, %v1301
      %v1303 = vpop.f32.mrf.mxu0
      %1304 = vdwg.mxu0
      %v1305 = vxor.u32 %v1289, 2147483648
      %v1306 = vxor.u32 %v1302, 2147483648
      %v1307 = vmul.f32 %v1305, 1.442695
      %v1308 = vpow.pop %v1307
      %v1309 = vmul.f32 %v1306, 1.442695
      %v1310 = vpow.pop %v1309
      %v1311 = vadd.f32 %v1308, 1.0
      %v1312 = vadd.f32 %v1310, 1.0
      %v1313 = vrcp.pop %v1311
      %v1314 = vmul.f32 %v1311, %v1313
      %v1315 = vsub.f32 1.0, %v1314
      %v1316 = vmul.f32 %v1313, %v1315
      %v1317 = vadd.f32 %v1313, %v1316
      %vm1318 = vweird.f32 %v1311
      %vm1319 = vweird.f32 %v1313
      %vm1320 = vmor %vm1318, %vm1319
      %v1321 = vsel %vm1320, %v1313, %v1317
      %v1322 = vand.u32 2147483647, %v1311
      %vm1323 = vcmp.eq.f32.partialorder %v1322, 8.507059e+37
      %v1324 = vand.u32 %v1311, 2147483648
      %v1325 = vor.u32 1.1754944e-38, %v1324
      %v1326 = vsel %vm1323, %v1325, %v1321
      %v1327 = vmul.f32 1.0, %v1326
      %v1328 = vrcp.pop %v1312
      %v1329 = vmul.f32 %v1312, %v1328
      %v1330 = vsub.f32 1.0, %v1329
      %v1331 = vmul.f32 %v1328, %v1330
      %v1332 = vadd.f32 %v1328, %v1331
      %vm1333 = vweird.f32 %v1312
      %vm1334 = vweird.f32 %v1328
      %vm1335 = vmor %vm1333, %vm1334
      %v1336 = vsel %vm1335, %v1328, %v1332
      %v1337 = vand.u32 2147483647, %v1312
      %vm1338 = vcmp.eq.f32.partialorder %v1337, 8.507059e+37
      %v1339 = vand.u32 %v1312, 2147483648
      %v1340 = vor.u32 1.1754944e-38, %v1339
      %v1341 = vsel %vm1338, %v1340, %v1336
      %v1342 = vmul.f32 1.0, %v1341
      %v1343 = vperm.slane %v1327, 0
      %v1344 = vperm.slane %v1342, 0
      %v1347 = vrot.slane %v1344, 4
      %v1348 = vsel %vm481, %v1343, %v1347
      %v1350 = vmul.f32 %v1163, %v1348
      %1351 = vst [vmem:[%s453] sm:$0xff] %v1350
      %s1352 = smul.u32 2, %s28
      %p1353 = scmp.lt.s32.totalorder %s27, 1
      %s1354 = scalar_select %p1353, %s27, 1
      %p1355 = scmp.lt.s32.totalorder %s1352, 1
      %s1356 = scalar_select %p1355, %s1352, 1
      %s1357 = smul.addr %s1354, 2
      %s1358 = sadd.s32 %s1356, %s1357
      %s1359 = smul.addr %s1358, 4
      %s1360 = scalar_lea.vmem %s11, %s1359
      // Predicated region
      $region65: #{unet_block_attention_pallas.1} parent=63 // pred_check
        %p1361 = pneg %p300
      $region66: #{unet_block_attention_pallas.1} parent=63 // pred_check_branch
        %1363 = sbr.rel (%p1361) target = $region68
      $region67: #{unet_block_attention_pallas.1} parent=63 // pred_region
        %s1364 = smul.u32 2, %s28
      $region68: #{unet_block_attention_pallas.1} parent=63 // pred_fallthru
        _
    $region64: #{unet_block_attention_pallas.1} parent=5 // pred_fallthru
      _
    %p1365 = scmp.le.s32.totalorder 2, %s18
    // Predicated region
    $region69: #{unet_block_attention_pallas.1} parent=5 // pred_check
      %p1366 = pneg %p1365
    $region70: #{unet_block_attention_pallas.1} parent=5 // pred_check_branch
      %1368 = sbr.rel (%p1366) target = $region72
    $region71: #{unet_block_attention_pallas.1} parent=5 // pred_region
      %s1369 = ssub.s32 %s18, 2
      // Predicated region
      $region73: #{unet_block_attention_pallas.1} parent=71 // pred_check
        %p1370 = pneg %p306
      $region74: #{unet_block_attention_pallas.1} parent=71 // pred_check_branch
        %1372 = sbr.rel (%p1370) target = $region76
      $region75: #{unet_block_attention_pallas.1} parent=71 // pred_region
        %s1373 = smul.u32 2, %s30
        %p1374 = scmp.lt.s32.totalorder %s29, 1
        %s1375 = scalar_select %p1374, %s29, 1
        %p1376 = scmp.lt.s32.totalorder %s1373, 1
        %s1377 = scalar_select %p1376, %s1373, 1
        %s1378 = smul.addr %s1375, 2
        %s1379 = sadd.s32 %s1377, %s1378
        %s1380 = smul.addr %s1379, 4
        %s1381 = scalar_lea.vmem %s11, %s1380
      $region76: #{unet_block_attention_pallas.1} parent=71 // pred_fallthru
        _
    $region72: #{unet_block_attention_pallas.1} parent=5 // pred_fallthru
      _
  $region6: #{unet_block_attention_pallas.1} parent=0 // loop_footer
    %s22 = sadd.s32 1, %s18
  $region7: #{unet_block_attention_pallas.1} parent=0 // loop_footer_branch
    %17 = sbr.rel target = $region3
  $region8: #{unet_block_attention_pallas.1} parent=0 // loop_exit
    _

</llo_original>
